<compile_context>
chip_gen: v6e
topology: v6e:2x2x1
jax: 0.10.0
libtpu: 0.0.40
codegen_flags: <defaults>
</compile_context>

<pallas_src>
import jax
import jax.numpy as jnp
from jax import lax
from jax.experimental import pallas as pl
from jax.experimental.pallas import tpu as pltpu

# ---------- shapes ----------
B, C, H, W = 2, 3, 16, 16          # input images (NCHW), resnet-style 3 channels
RES_W, RES_H = 8, 8                # uv_resolution_shape
P = RES_H * RES_W                  # output sample points (64)
FEAT = 1000                        # resnet50 feature dim (module contract)
FEAT_PAD = 1024                    # lane-aligned padding
HID = 64                           # surrogate backbone hidden width
OFF_SCALE = 0.1                    # tanh offset scale (normalized coords)

assert B == 2 and H == W            # kernel specializes the batch mask / shared iota
assert B * P == 128 and B * H == 32


# ---------------- single fused Pallas kernel ----------------

def fused_kernel(x3_ref, xbd_ref, w1_ref, b1_ref, w2_ref, b2_ref,
                 wcu_ref, wcv_ref, bcu_ref, bcv_ref, bux_ref, bvy_ref,
                 feat_ref, y_ref):
    # ---- surrogate backbone: GAP (full 256-lane reduce) + VPU first layer ----
    x3 = x3_ref[...]                                   # (B, C, HW) f32
    gap = jnp.mean(x3, axis=-1)                        # (B, C)

    w1 = w1_ref[...]                                   # (C, HID)
    h = b1_ref[...]                                    # (1, HID)
    for c in range(C):                                 # VPU mul-adds (no MXU latency)
        h = h + gap[:, c:c + 1] * w1[c:c + 1, :]       # (B, HID)
    h = jnp.maximum(h, 0.0)                            # (B, HID) f32
    hb = h.astype(jnp.bfloat16)                        # bf16 into the MXU

    # features output (off the y_hat critical path)
    feat_ref[...] = (jnp.dot(hb, w2_ref[...], preferred_element_type=jnp.float32)
                     + b2_ref[...])                    # (B, FEAT_PAD)

    # ---- folded UV-offset head: z = h @ (w2 @ w_off) + bc, u/v lane-0 aligned ----
    zu = jnp.dot(hb, wcu_ref[...], preferred_element_type=jnp.float32) + bcu_ref[...]
    zv = jnp.dot(hb, wcv_ref[...], preferred_element_type=jnp.float32) + bcv_ref[...]
    gx2 = bux_ref[...] + (OFF_SCALE * 0.5 * W) * jnp.tanh(zu)     # (B, P) pixel x
    gy2 = bvy_ref[...] + (OFF_SCALE * 0.5 * H) * jnp.tanh(zv)     # (B, P) pixel y

    # pack the (b, p) axis into 128 lanes
    gx = jnp.concatenate([gx2[0:1, :], gx2[1:2, :]], axis=1)      # (1, B*P)
    gy = jnp.concatenate([gy2[0:1, :], gy2[1:2, :]], axis=1)      # (1, B*P)

    # ---- x.mean(dim=1) in block-diagonal layout (wrapper pre-arranged) ----
    img_bd = jnp.mean(xbd_ref[...], axis=0)            # (B*H, B*W)

    # ---- bilinear grid_sample (zeros padding, align_corners=False) ----
    r_i = lax.broadcasted_iota(jnp.int32, (B * H, B * P), 0)      # row index
    l_i = lax.broadcasted_iota(jnp.int32, (B * H, B * P), 1)      # lane index
    pos = jnp.bitwise_and(r_i, H - 1).astype(jnp.float32)         # spatial coord of row
    same_b = (r_i >= H) == (l_i >= P)                             # batch-match mask (B=2)
    ker_x = jnp.where(same_b, jnp.maximum(1.0 - jnp.abs(gx - pos), 0.0), 0.0)  # (B*W, B*P)
    ker_y = jnp.where(same_b, jnp.maximum(1.0 - jnp.abs(gy - pos), 0.0), 0.0)  # (B*H, B*P)

    # one clean MXU matmul for the W-contraction, sublane reduce for the H-contraction
    tmp = jnp.dot(img_bd, ker_x, preferred_element_type=jnp.float32)   # (B*H, B*P)
    y_ref[...] = jnp.sum(ker_y * tmp, axis=0, keepdims=True)           # (1, B*P)


# ---------------- wrappers / glue ----------------

def init_params(key):
    """Module-level (f32) parameters: surrogate backbone + UV-offset head."""
    ks = jax.random.split(key, 3)
    s = 0.05
    return dict(
        w1=s * jax.random.normal(ks[0], (C, HID), jnp.float32),
        b1=jnp.zeros((1, HID), jnp.float32),
        w2=s * jax.random.normal(ks[1], (HID, FEAT), jnp.float32),
        b2=jnp.zeros((1, FEAT), jnp.float32),
        w_off=s * jax.random.normal(ks[2], (FEAT, 2 * P), jnp.float32),
        b_off=jnp.zeros((1, 2 * P), jnp.float32),
    )


def prepare_params(p):
    """One-time wrapper-side prep: fold w_off through w2, pad FEAT to 1024, cast big
    weights to bf16, split u/v so each starts at lane 0, build pixel-coord base grid."""
    wc = p['w2'] @ p['w_off']                          # (HID, 2P) folded head
    bc = p['b2'] @ p['w_off'] + p['b_off']             # (1, 2P)
    w2_pad = jnp.pad(p['w2'], ((0, 0), (0, FEAT_PAD - FEAT)))
    b2_pad = jnp.pad(p['b2'], ((0, 0), (0, FEAT_PAD - FEAT)))

    # identity grid in pixel coords (align_corners=False); p = i*RES_W + j (row-major)
    base_u = jnp.linspace(-1.0, 1.0, RES_W, dtype=jnp.float32)
    base_v = jnp.linspace(-1.0, 1.0, RES_H, dtype=jnp.float32)
    u_flat = jnp.tile(base_u, (RES_H,))
    v_flat = jnp.repeat(base_v, RES_W)
    bux = (((u_flat + 1.0) * W - 1.0) * 0.5).reshape(1, P)
    bvy = (((v_flat + 1.0) * H - 1.0) * 0.5).reshape(1, P)

    return dict(
        w1=p['w1'], b1=p['b1'],
        w2=w2_pad.astype(jnp.bfloat16), b2=b2_pad,
        wcu=wc[:, :P].astype(jnp.bfloat16), wcv=wc[:, P:].astype(jnp.bfloat16),
        bcu=bc[:, :P], bcv=bc[:, P:],
        bux=bux, bvy=bvy,
    )


def forward(kp, x):
    # layout plumbing only (same values, no compute hoisted out of the kernel):
    #  - flat spatial view for the GAP reduce
    #  - block-diagonal per-batch view for the sampling matmul
    x3 = x.reshape(B, C, H * W)
    x_bd = jnp.zeros((C, B * H, B * W), jnp.float32)
    for b in range(B):
        x_bd = x_bd.at[:, b * H:(b + 1) * H, b * W:(b + 1) * W].set(x[b])

    vmem = pl.BlockSpec(memory_space=pltpu.MemorySpace.VMEM)
    feat_pad, y_flat = pl.pallas_call(
        fused_kernel,
        out_shape=(jax.ShapeDtypeStruct((B, FEAT_PAD), jnp.float32),
                   jax.ShapeDtypeStruct((1, B * P), jnp.float32)),
        in_specs=[vmem] * 12,
        out_specs=(vmem, vmem),
    )(x3, x_bd, kp['w1'], kp['b1'], kp['w2'], kp['b2'],
      kp['wcu'], kp['wcv'], kp['bcu'], kp['bcv'], kp['bux'], kp['bvy'])

    features = feat_pad[:, :FEAT]                      # back to (B, 1000)
    y_hat = y_flat.reshape(B, 1, RES_H, RES_W)         # lane order is (b, i, j)-major
    return y_hat, features


if __name__ == "__main__":
    key = jax.random.PRNGKey(0)
    kx, kparam = jax.random.split(key)
    x = jax.random.uniform(kx, (B, C, H, W), dtype=jnp.float32)   # image-like input
    params = init_params(kparam)
    kernel_params = prepare_params(params)             # one-time fold / cast / pad

    y_hat, feats = jax.jit(forward)(kernel_params, x)
    jax.block_until_ready(y_hat)

    assert y_hat.shape == (B, 1, RES_H, RES_W), y_hat.shape
    assert feats.shape == (B, FEAT), feats.shape
    assert bool(jnp.all(jnp.isfinite(y_hat)))
    print("KERNEL_OK")
</pallas_src>

<mosaic_0001>
module attributes {stable_mosaic.version = 11 : i64} {
  func.func @fused_kernel(%arg0: memref<2x3x256xf32, #tpu.memory_space<vmem>>, %arg1: memref<3x32x32xf32, #tpu.memory_space<vmem>>, %arg2: memref<3x64xf32, #tpu.memory_space<vmem>>, %arg3: memref<1x64xf32, #tpu.memory_space<vmem>>, %arg4: memref<64x1024xbf16, #tpu.memory_space<vmem>>, %arg5: memref<1x1024xf32, #tpu.memory_space<vmem>>, %arg6: memref<64x64xbf16, #tpu.memory_space<vmem>>, %arg7: memref<64x64xbf16, #tpu.memory_space<vmem>>, %arg8: memref<1x64xf32, #tpu.memory_space<vmem>>, %arg9: memref<1x64xf32, #tpu.memory_space<vmem>>, %arg10: memref<1x64xf32, #tpu.memory_space<vmem>>, %arg11: memref<1x64xf32, #tpu.memory_space<vmem>>, %arg12: memref<2x1024xf32, #tpu.memory_space<vmem>>, %arg13: memref<1x128xf32, #tpu.memory_space<vmem>>) attributes {dimension_semantics = [], scalar_prefetch = 0 : i64, scratch_operands = 0 : i64, tpu.core_type = #tpu.core_type<tc>} {
    %c0 = arith.constant 0 : index
    %c0_0 = arith.constant 0 : index
    %c0_1 = arith.constant 0 : index
    %0 = vector.load %arg0[%c0, %c0_0, %c0_1] : memref<2x3x256xf32, #tpu.memory_space<vmem>>, vector<2x3x256xf32>
    %cst = arith.constant dense<0.000000e+00> : vector<2x3xf32>
    %1 = vector.multi_reduction <add>, %0, %cst [2] : vector<2x3x256xf32> to vector<2x3xf32>
    %cst_2 = arith.constant 2.560000e+02 : f32
    %2 = vector.broadcast %cst_2 : f32 to vector<2x3xf32>
    %3 = arith.divf %1, %2 : vector<2x3xf32>
    %c0_3 = arith.constant 0 : index
    %c0_4 = arith.constant 0 : index
    %4 = vector.load %arg2[%c0_3, %c0_4] : memref<3x64xf32, #tpu.memory_space<vmem>>, vector<3x64xf32>
    %c0_5 = arith.constant 0 : index
    %c0_6 = arith.constant 0 : index
    %5 = vector.load %arg3[%c0_5, %c0_6] : memref<1x64xf32, #tpu.memory_space<vmem>>, vector<1x64xf32>
    %6 = vector.extract_strided_slice %3 {offsets = [0, 0], sizes = [2, 1], strides = [1, 1]} : vector<2x3xf32> to vector<2x1xf32>
    %7 = vector.extract_strided_slice %4 {offsets = [0, 0], sizes = [1, 64], strides = [1, 1]} : vector<3x64xf32> to vector<1x64xf32>
    %8 = vector.broadcast %6 : vector<2x1xf32> to vector<2x64xf32>
    %9 = vector.broadcast %7 : vector<1x64xf32> to vector<2x64xf32>
    %10 = arith.mulf %8, %9 : vector<2x64xf32>
    %11 = vector.broadcast %5 : vector<1x64xf32> to vector<2x64xf32>
    %12 = arith.addf %11, %10 : vector<2x64xf32>
    %13 = vector.extract_strided_slice %3 {offsets = [0, 1], sizes = [2, 1], strides = [1, 1]} : vector<2x3xf32> to vector<2x1xf32>
    %14 = vector.extract_strided_slice %4 {offsets = [1, 0], sizes = [1, 64], strides = [1, 1]} : vector<3x64xf32> to vector<1x64xf32>
    %15 = vector.broadcast %13 : vector<2x1xf32> to vector<2x64xf32>
    %16 = vector.broadcast %14 : vector<1x64xf32> to vector<2x64xf32>
    %17 = arith.mulf %15, %16 : vector<2x64xf32>
    %18 = arith.addf %12, %17 : vector<2x64xf32>
    %19 = vector.extract_strided_slice %3 {offsets = [0, 2], sizes = [2, 1], strides = [1, 1]} : vector<2x3xf32> to vector<2x1xf32>
    %20 = vector.extract_strided_slice %4 {offsets = [2, 0], sizes = [1, 64], strides = [1, 1]} : vector<3x64xf32> to vector<1x64xf32>
    %21 = vector.broadcast %19 : vector<2x1xf32> to vector<2x64xf32>
    %22 = vector.broadcast %20 : vector<1x64xf32> to vector<2x64xf32>
    %23 = arith.mulf %21, %22 : vector<2x64xf32>
    %24 = arith.addf %18, %23 : vector<2x64xf32>
    %cst_7 = arith.constant 0.000000e+00 : f32
    %25 = vector.broadcast %cst_7 : f32 to vector<2x64xf32>
    %26 = arith.maximumf %24, %25 : vector<2x64xf32>
    %27 = arith.truncf %26 : vector<2x64xf32> to vector<2x64xbf16>
    %c0_8 = arith.constant 0 : index
    %c0_9 = arith.constant 0 : index
    %28 = vector.load %arg4[%c0_8, %c0_9] : memref<64x1024xbf16, #tpu.memory_space<vmem>>, vector<64x1024xbf16>
    %cst_10 = arith.constant dense<0.000000e+00> : vector<2x1024xf32>
    %29 = tpu.matmul %27, %28, %cst_10 {dimension_numbers = #tpu.dot_dimension_numbers<[1], [0], [0], [1], [0, 0, 1, 1], [], []>} : vector<2x64xbf16>, vector<64x1024xbf16>, vector<2x1024xf32> -> vector<2x1024xf32>
    %c0_11 = arith.constant 0 : index
    %c0_12 = arith.constant 0 : index
    %30 = vector.load %arg5[%c0_11, %c0_12] : memref<1x1024xf32, #tpu.memory_space<vmem>>, vector<1x1024xf32>
    %31 = vector.broadcast %30 : vector<1x1024xf32> to vector<2x1024xf32>
    %32 = arith.addf %29, %31 : vector<2x1024xf32>
    %c0_13 = arith.constant 0 : index
    %c0_14 = arith.constant 0 : index
    %33 = vector.load %arg12[%c0_13, %c0_14] : memref<2x1024xf32, #tpu.memory_space<vmem>>, vector<2x1024xf32>
    tpu.vector_store %arg12[%c0_13, %c0_14], %32 {strides = array<i32>} : memref<2x1024xf32, #tpu.memory_space<vmem>>, vector<2x1024xf32>,
    %c0_15 = arith.constant 0 : index
    %c0_16 = arith.constant 0 : index
    %34 = vector.load %arg6[%c0_15, %c0_16] : memref<64x64xbf16, #tpu.memory_space<vmem>>, vector<64x64xbf16>
    %cst_17 = arith.constant dense<0.000000e+00> : vector<2x64xf32>
    %35 = tpu.matmul %27, %34, %cst_17 {dimension_numbers = #tpu.dot_dimension_numbers<[1], [0], [0], [1], [0, 0, 1, 1], [], []>} : vector<2x64xbf16>, vector<64x64xbf16>, vector<2x64xf32> -> vector<2x64xf32>
    %c0_18 = arith.constant 0 : index
    %c0_19 = arith.constant 0 : index
    %36 = vector.load %arg8[%c0_18, %c0_19] : memref<1x64xf32, #tpu.memory_space<vmem>>, vector<1x64xf32>
    %37 = vector.broadcast %36 : vector<1x64xf32> to vector<2x64xf32>
    %38 = arith.addf %35, %37 : vector<2x64xf32>
    %c0_20 = arith.constant 0 : index
    %c0_21 = arith.constant 0 : index
    %39 = vector.load %arg7[%c0_20, %c0_21] : memref<64x64xbf16, #tpu.memory_space<vmem>>, vector<64x64xbf16>
    %cst_22 = arith.constant dense<0.000000e+00> : vector<2x64xf32>
    %40 = tpu.matmul %27, %39, %cst_22 {dimension_numbers = #tpu.dot_dimension_numbers<[1], [0], [0], [1], [0, 0, 1, 1], [], []>} : vector<2x64xbf16>, vector<64x64xbf16>, vector<2x64xf32> -> vector<2x64xf32>
    %c0_23 = arith.constant 0 : index
    %c0_24 = arith.constant 0 : index
    %41 = vector.load %arg9[%c0_23, %c0_24] : memref<1x64xf32, #tpu.memory_space<vmem>>, vector<1x64xf32>
    %42 = vector.broadcast %41 : vector<1x64xf32> to vector<2x64xf32>
    %43 = arith.addf %40, %42 : vector<2x64xf32>
    %c0_25 = arith.constant 0 : index
    %c0_26 = arith.constant 0 : index
    %44 = vector.load %arg10[%c0_25, %c0_26] : memref<1x64xf32, #tpu.memory_space<vmem>>, vector<1x64xf32>
    %45 = math.tanh %38 : vector<2x64xf32>
    %cst_27 = arith.constant 8.000000e-01 : f32
    %46 = vector.broadcast %cst_27 : f32 to vector<2x64xf32>
    %47 = arith.mulf %46, %45 : vector<2x64xf32>
    %48 = vector.broadcast %44 : vector<1x64xf32> to vector<2x64xf32>
    %49 = arith.addf %48, %47 : vector<2x64xf32>
    %c0_28 = arith.constant 0 : index
    %c0_29 = arith.constant 0 : index
    %50 = vector.load %arg11[%c0_28, %c0_29] : memref<1x64xf32, #tpu.memory_space<vmem>>, vector<1x64xf32>
    %51 = math.tanh %43 : vector<2x64xf32>
    %cst_30 = arith.constant 8.000000e-01 : f32
    %52 = vector.broadcast %cst_30 : f32 to vector<2x64xf32>
    %53 = arith.mulf %52, %51 : vector<2x64xf32>
    %54 = vector.broadcast %50 : vector<1x64xf32> to vector<2x64xf32>
    %55 = arith.addf %54, %53 : vector<2x64xf32>
    %56 = vector.extract_strided_slice %49 {offsets = [0, 0], sizes = [1, 64], strides = [1, 1]} : vector<2x64xf32> to vector<1x64xf32>
    %57 = vector.extract_strided_slice %49 {offsets = [1, 0], sizes = [1, 64], strides = [1, 1]} : vector<2x64xf32> to vector<1x64xf32>
    %58 = tpu.concatenate %56, %57 in 1 : vector<1x64xf32>, vector<1x64xf32> -> vector<1x128xf32>
    %59 = vector.extract_strided_slice %55 {offsets = [0, 0], sizes = [1, 64], strides = [1, 1]} : vector<2x64xf32> to vector<1x64xf32>
    %60 = vector.extract_strided_slice %55 {offsets = [1, 0], sizes = [1, 64], strides = [1, 1]} : vector<2x64xf32> to vector<1x64xf32>
    %61 = tpu.concatenate %59, %60 in 1 : vector<1x64xf32>, vector<1x64xf32> -> vector<1x128xf32>
    %c0_31 = arith.constant 0 : index
    %c0_32 = arith.constant 0 : index
    %c0_33 = arith.constant 0 : index
    %62 = vector.load %arg1[%c0_31, %c0_32, %c0_33] : memref<3x32x32xf32, #tpu.memory_space<vmem>>, vector<3x32x32xf32>
    %cst_34 = arith.constant dense<0.000000e+00> : vector<32x32xf32>
    %63 = vector.multi_reduction <add>, %62, %cst_34 [0] : vector<3x32x32xf32> to vector<32x32xf32>
    %cst_35 = arith.constant 3.000000e+00 : f32
    %64 = vector.broadcast %cst_35 : f32 to vector<32x32xf32>
    %65 = arith.divf %63, %64 : vector<32x32xf32>
    %66 = tpu.iota {dimensions = array<i32: 0>} : vector<32x128xi32>
    %67 = tpu.iota {dimensions = array<i32: 1>} : vector<32x128xi32>
    %c15_i32 = arith.constant 15 : i32
    %68 = vector.broadcast %c15_i32 : i32 to vector<32x128xi32>
    %69 = arith.andi %66, %68 : vector<32x128xi32>
    %70 = arith.sitofp %69 : vector<32x128xi32> to vector<32x128xf32>
    %c16_i32 = arith.constant 16 : i32
    %71 = vector.broadcast %c16_i32 : i32 to vector<32x128xi32>
    %72 = arith.cmpi sge, %66, %71 : vector<32x128xi32>
    %c64_i32 = arith.constant 64 : i32
    %73 = vector.broadcast %c64_i32 : i32 to vector<32x128xi32>
    %74 = arith.cmpi sge, %67, %73 : vector<32x128xi32>
    %75 = arith.xori %72, %74 : vector<32x128xi1>
    %cst_36 = arith.constant dense<true> : vector<32x128xi1>
    %76 = arith.xori %75, %cst_36 : vector<32x128xi1>
    %77 = vector.broadcast %58 : vector<1x128xf32> to vector<32x128xf32>
    %78 = arith.subf %77, %70 : vector<32x128xf32>
    %79 = math.absf %78 : vector<32x128xf32>
    %cst_37 = arith.constant 1.000000e+00 : f32
    %80 = vector.broadcast %cst_37 : f32 to vector<32x128xf32>
    %81 = arith.subf %80, %79 : vector<32x128xf32>
    %cst_38 = arith.constant 0.000000e+00 : f32
    %82 = vector.broadcast %cst_38 : f32 to vector<32x128xf32>
    %83 = arith.maximumf %81, %82 : vector<32x128xf32>
    %cst_39 = arith.constant 0.000000e+00 : f32
    %84 = vector.broadcast %cst_39 : f32 to vector<32x128xf32>
    %85 = arith.select %76, %83, %84 : vector<32x128xi1>, vector<32x128xf32>
    %86 = vector.broadcast %61 : vector<1x128xf32> to vector<32x128xf32>
    %87 = arith.subf %86, %70 : vector<32x128xf32>
    %88 = math.absf %87 : vector<32x128xf32>
    %cst_40 = arith.constant 1.000000e+00 : f32
    %89 = vector.broadcast %cst_40 : f32 to vector<32x128xf32>
    %90 = arith.subf %89, %88 : vector<32x128xf32>
    %cst_41 = arith.constant 0.000000e+00 : f32
    %91 = vector.broadcast %cst_41 : f32 to vector<32x128xf32>
    %92 = arith.maximumf %90, %91 : vector<32x128xf32>
    %cst_42 = arith.constant 0.000000e+00 : f32
    %93 = vector.broadcast %cst_42 : f32 to vector<32x128xf32>
    %94 = arith.select %76, %92, %93 : vector<32x128xi1>, vector<32x128xf32>
    %cst_43 = arith.constant dense<0.000000e+00> : vector<32x128xf32>
    %95 = tpu.matmul %65, %85, %cst_43 {dimension_numbers = #tpu.dot_dimension_numbers<[1], [0], [0], [1], [0, 0, 1, 1], [], []>} : vector<32x32xf32>, vector<32x128xf32>, vector<32x128xf32> -> vector<32x128xf32>
    %96 = arith.mulf %94, %95 : vector<32x128xf32>
    %cst_44 = arith.constant dense<0.000000e+00> : vector<128xf32>
    %97 = vector.multi_reduction <add>, %96, %cst_44 [0] : vector<32x128xf32> to vector<128xf32>
    %98 = vector.shape_cast %97 : vector<128xf32> to vector<1x128xf32>
    %c0_45 = arith.constant 0 : index
    %c0_46 = arith.constant 0 : index
    %99 = vector.load %arg13[%c0_45, %c0_46] : memref<1x128xf32, #tpu.memory_space<vmem>>, vector<1x128xf32>
    tpu.vector_store %arg13[%c0_45, %c0_46], %98 {strides = array<i32>} : memref<1x128xf32, #tpu.memory_space<vmem>>, vector<1x128xf32>,
    return
  }
}

</mosaic_0001>

<llo_original>
// kernel: forward.1
$region0: #{forward.1}
  #allocation0 [shape = 'u32[]', space=smem, size = 0x4, offset = 0x4, fixed_abs, tag = 'smem constant byte address 0x4 - core index']
  #allocation1 [shape = 'u32[144,128]{1,0:T(1,128)}', space=vmem, size = 0x12000, scoped, tag = 'internal scratch']
  %s0 = inlined_call_operand.vmem [shape: f32[2,3,256], index: 0, kind: input, shape index: {}]
  %s1 = inlined_call_operand.vmem [shape: f32[3,32,32], index: 1, kind: input, shape index: {}]
  %s2 = inlined_call_operand.vmem [shape: f32[3,64], index: 2, kind: input, shape index: {}]
  %s3 = inlined_call_operand.vmem [shape: f32[1,64], index: 3, kind: input, shape index: {}]
  %s4 = inlined_call_operand.vmem [shape: bf16[64,1024], index: 4, kind: input, shape index: {}]
  %s5 = inlined_call_operand.vmem [shape: f32[1,1024], index: 5, kind: input, shape index: {}]
  %s6 = inlined_call_operand.vmem [shape: bf16[64,64], index: 6, kind: input, shape index: {}]
  %s7 = inlined_call_operand.vmem [shape: bf16[64,64], index: 7, kind: input, shape index: {}]
  %s8 = inlined_call_operand.vmem [shape: f32[1,64], index: 8, kind: input, shape index: {}]
  %s9 = inlined_call_operand.vmem [shape: f32[1,64], index: 9, kind: input, shape index: {}]
  %s10 = inlined_call_operand.vmem [shape: f32[1,64], index: 10, kind: input, shape index: {}]
  %s11 = inlined_call_operand.vmem [shape: f32[1,64], index: 11, kind: input, shape index: {}]
  %s12 = inlined_call_operand.hbm [shape: f32[2,1024], index: 12, kind: output, shape index: {0}]
  %s13 = inlined_call_operand.vmem [shape: f32[1,128], index: 13, kind: output, shape index: {1}]
  %14 = xla_tuple %s12, %s13
  %s15 = sld [smem:[#allocation0]]
  $region66: #{forward.1} parent=0
    _
  %s17 = ssub.s32 1, %s15
  %s18 = scalar_select 0, %s17, %s15
  $region1: #{forward.1} parent=0
    #allocation2 [shape = 'u8[8192]{0}', space=vmem, size = 0x2000, scoped, tag = 'output window, operand 0, single buffered']
    #allocation3 [shape = 's32[1]{0}', space=sflag, size = 0x4, scoped, tag = 'scoped memory for forward.1']
    %19 = vsyncpa [#allocation3], 0
    // Predicated region
    $region2: #{forward.1} parent=1 // pred_check
      _
    $region3: #{forward.1} parent=1 // pred_check_branch
      %21 = sbr.rel (0) target = $region5
    $region4: #{forward.1} parent=1 // pred_region
      _
    $region5: #{forward.1} parent=1 // pred_fallthru
      _
    // Predicated region
    $region6: #{forward.1} parent=1 // pred_check
      _
    $region7: #{forward.1} parent=1 // pred_check_branch
      %23 = sbr.rel (0) target = $region9
    $region8: #{forward.1} parent=1 // pred_region
      _
    $region9: #{forward.1} parent=1 // pred_fallthru
      _
    // Predicated region
    $region10: #{forward.1} parent=1 // pred_check
      _
    $region11: #{forward.1} parent=1 // pred_check_branch
      %25 = sbr.rel (0) target = $region13
    $region12: #{forward.1} parent=1 // pred_region
      _
    $region13: #{forward.1} parent=1 // pred_fallthru
      _
    // Predicated region
    $region14: #{forward.1} parent=1 // pred_check
      _
    $region15: #{forward.1} parent=1 // pred_check_branch
      %27 = sbr.rel (0) target = $region17
    $region16: #{forward.1} parent=1 // pred_region
      _
    $region17: #{forward.1} parent=1 // pred_fallthru
      _
    // Predicated region
    $region18: #{forward.1} parent=1 // pred_check
      _
    $region19: #{forward.1} parent=1 // pred_check_branch
      %29 = sbr.rel (0) target = $region21
    $region20: #{forward.1} parent=1 // pred_region
      _
    $region21: #{forward.1} parent=1 // pred_fallthru
      _
    // Predicated region
    $region22: #{forward.1} parent=1 // pred_check
      _
    $region23: #{forward.1} parent=1 // pred_check_branch
      %31 = sbr.rel (0) target = $region25
    $region24: #{forward.1} parent=1 // pred_region
      _
    $region25: #{forward.1} parent=1 // pred_fallthru
      _
    // Predicated region
    $region26: #{forward.1} parent=1 // pred_check
      _
    $region27: #{forward.1} parent=1 // pred_check_branch
      %33 = sbr.rel (0) target = $region29
    $region28: #{forward.1} parent=1 // pred_region
      _
    $region29: #{forward.1} parent=1 // pred_fallthru
      _
    // Predicated region
    $region30: #{forward.1} parent=1 // pred_check
      _
    $region31: #{forward.1} parent=1 // pred_check_branch
      %35 = sbr.rel (0) target = $region33
    $region32: #{forward.1} parent=1 // pred_region
      _
    $region33: #{forward.1} parent=1 // pred_fallthru
      _
    // Predicated region
    $region34: #{forward.1} parent=1 // pred_check
      _
    $region35: #{forward.1} parent=1 // pred_check_branch
      %37 = sbr.rel (0) target = $region37
    $region36: #{forward.1} parent=1 // pred_region
      _
    $region37: #{forward.1} parent=1 // pred_fallthru
      _
    // Predicated region
    $region38: #{forward.1} parent=1 // pred_check
      _
    $region39: #{forward.1} parent=1 // pred_check_branch
      %39 = sbr.rel (0) target = $region41
    $region40: #{forward.1} parent=1 // pred_region
      _
    $region41: #{forward.1} parent=1 // pred_fallthru
      _
    // Predicated region
    $region42: #{forward.1} parent=1 // pred_check
      _
    $region43: #{forward.1} parent=1 // pred_check_branch
      %41 = sbr.rel (0) target = $region45
    $region44: #{forward.1} parent=1 // pred_region
      _
    $region45: #{forward.1} parent=1 // pred_fallthru
      _
    // Predicated region
    $region46: #{forward.1} parent=1 // pred_check
      _
    $region47: #{forward.1} parent=1 // pred_check_branch
      %43 = sbr.rel (0) target = $region49
    $region48: #{forward.1} parent=1 // pred_region
      _
    $region49: #{forward.1} parent=1 // pred_fallthru
      _
    %v45 = vld [vmem:[%s0] sm:$0x77]
    %v46 = vld [vmem:[%s0 + $0x8] sm:$0x77]
    %v49 = vcombine.high %v45, %v45
    %v50 = vcombine.high %v46, %v46
    %vm53 = vcmask 1042432
    %v54 = vsel %vm53, %v45, 0.0
    %v55 = vsel %vm53, %v49, 0.0
    %v56 = vadd.f32 %v54, %v55
    %57 = vadd.xlane.f32.xlu0 %v56
    %v58 = vpop.xlane.xlu0 %57
    %v59 = vsel %vm53, %v46, 0.0
    %v60 = vsel %vm53, %v50, 0.0
    %v61 = vadd.f32 %v59, %v60
    %62 = vadd.xlane.f32.xlu0 %v61
    %v63 = vpop.xlane.xlu0 %62
    %v64 = vrcp.pop 256.0
    %v65 = vmul.f32 %v58, %v64
    %v66 = vmul.f32 %v63, %v64
    %v67 = vld [vmem:[%s2] sm:$0x7]
    %v68 = vld [vmem:[%s3] sm:$0x1]
    %v69 = vlaneseq
    %v70 = vshrl.u32 %v69, 7
    %v71 = vsub.s32 0, %v70
    %v72 = vrot.slane %v65, %v71
    %v73 = vlaneseq
    %v74 = vshrl.u32 %v73, 7
    %v75 = vsub.s32 0, %v74
    %v76 = vrot.slane %v66, %v75
    %v77 = vlaneseq
    %v78 = vshrl.u32 %v77, 7
    %v79 = vsub.s32 0, %v78
    %v80 = vrot.slane %v67, %v79
    %83 = vbcast.lane.b32.xlu0 %v80, 256
    %v84 = vpop.permute.xlu0 %83
    %s86 = sor.u32 256, 8
    %87 = vbcast.lane.b32.xlu0 %v80, %s86
    %v88 = vpop.permute.xlu0 %87
    %s90 = sor.u32 256, 16
    %91 = vbcast.lane.b32.xlu0 %v80, %s90
    %v92 = vpop.permute.xlu0 %91
    %s94 = sor.u32 256, 24
    %95 = vbcast.lane.b32.xlu0 %v80, %s94
    %v96 = vpop.permute.xlu0 %95
    %s98 = sor.u32 256, 32
    %99 = vbcast.lane.b32.xlu0 %v80, %s98
    %v100 = vpop.permute.xlu0 %99
    %s102 = sor.u32 256, 40
    %103 = vbcast.lane.b32.xlu0 %v80, %s102
    %v104 = vpop.permute.xlu0 %103
    %s106 = sor.u32 256, 48
    %107 = vbcast.lane.b32.xlu0 %v80, %s106
    %v108 = vpop.permute.xlu0 %107
    %s110 = sor.u32 256, 56
    %111 = vbcast.lane.b32.xlu0 %v80, %s110
    %v112 = vpop.permute.xlu0 %111
    %v121 = vmul.f32 %v72, %v84
    %v122 = vmul.f32 %v72, %v88
    %v123 = vmul.f32 %v72, %v92
    %v124 = vmul.f32 %v72, %v96
    %v125 = vmul.f32 %v72, %v100
    %v126 = vmul.f32 %v72, %v104
    %v127 = vmul.f32 %v72, %v108
    %v128 = vmul.f32 %v72, %v112
    %v129 = vmul.f32 %v76, %v84
    %v130 = vmul.f32 %v76, %v88
    %v131 = vmul.f32 %v76, %v92
    %v132 = vmul.f32 %v76, %v96
    %v133 = vmul.f32 %v76, %v100
    %v134 = vmul.f32 %v76, %v104
    %v135 = vmul.f32 %v76, %v108
    %v136 = vmul.f32 %v76, %v112
    %v138 = vlaneseq
    %v139 = vshrl.u32 %v138, 7
    %v140 = vsub.s32 0, %v139
    %v141 = vrot.slane %v68, %v140
    %159 = vset.pattern.permute.xlu0 0
    %160 = vperm.xlu0 %159, %v121
    %v161 = vpop.permute.xlu0 %160
    %162 = vset.pattern.permute.xlu0 0
    %163 = vperm.xlu0 %162, %v122
    %v164 = vpop.permute.xlu0 %163
    %165 = vset.pattern.permute.xlu0 0
    %166 = vperm.xlu0 %165, %v123
    %v167 = vpop.permute.xlu0 %166
    %168 = vset.pattern.permute.xlu0 0
    %169 = vperm.xlu0 %168, %v124
    %v170 = vpop.permute.xlu0 %169
    %171 = vset.pattern.permute.xlu0 0
    %172 = vperm.xlu0 %171, %v125
    %v173 = vpop.permute.xlu0 %172
    %174 = vset.pattern.permute.xlu0 0
    %175 = vperm.xlu0 %174, %v126
    %v176 = vpop.permute.xlu0 %175
    %177 = vset.pattern.permute.xlu0 0
    %178 = vperm.xlu0 %177, %v127
    %v179 = vpop.permute.xlu0 %178
    %180 = vset.pattern.permute.xlu0 0
    %181 = vperm.xlu0 %180, %v128
    %v182 = vpop.permute.xlu0 %181
    %183 = vset.pattern.permute.xlu0 0
    %184 = vperm.xlu0 %183, %v129
    %v185 = vpop.permute.xlu0 %184
    %186 = vset.pattern.permute.xlu0 0
    %187 = vperm.xlu0 %186, %v130
    %v188 = vpop.permute.xlu0 %187
    %189 = vset.pattern.permute.xlu0 0
    %190 = vperm.xlu0 %189, %v131
    %v191 = vpop.permute.xlu0 %190
    %192 = vset.pattern.permute.xlu0 0
    %193 = vperm.xlu0 %192, %v132
    %v194 = vpop.permute.xlu0 %193
    %195 = vset.pattern.permute.xlu0 0
    %196 = vperm.xlu0 %195, %v133
    %v197 = vpop.permute.xlu0 %196
    %198 = vset.pattern.permute.xlu0 0
    %199 = vperm.xlu0 %198, %v134
    %v200 = vpop.permute.xlu0 %199
    %201 = vset.pattern.permute.xlu0 0
    %202 = vperm.xlu0 %201, %v135
    %v203 = vpop.permute.xlu0 %202
    %204 = vset.pattern.permute.xlu0 0
    %205 = vperm.xlu0 %204, %v136
    %v206 = vpop.permute.xlu0 %205
    %v207 = vlaneseq
    %v208 = vand.u32 %v207, 127
    %v209 = vlaneseq
    %v210 = vshrl.u32 %v209, 7
    %v211 = vsub.s32 %v208, %v210
    %v212 = vrot.slane %v161, %v211
    %v213 = vadd.s32 %v208, 4294967288
    %v214 = vlaneseq
    %v215 = vshrl.u32 %v214, 7
    %v216 = vsub.s32 %v213, %v215
    %v217 = vrot.slane %v164, %v216
    %vm218 = vcmask 130112
    %v219 = vsel %vm218, %v217, %v212
    %v220 = vadd.s32 %v208, 4294967280
    %v221 = vlaneseq
    %v222 = vshrl.u32 %v221, 7
    %v223 = vsub.s32 %v220, %v222
    %v224 = vrot.slane %v167, %v223
    %vm225 = vcmask 195712
    %v226 = vsel %vm225, %v224, %v219
    %v227 = vadd.s32 %v208, 4294967272
    %v228 = vlaneseq
    %v229 = vshrl.u32 %v228, 7
    %v230 = vsub.s32 %v227, %v229
    %v231 = vrot.slane %v170, %v230
    %vm232 = vcmask 261312
    %v233 = vsel %vm232, %v231, %v226
    %v234 = vadd.s32 %v208, 4294967264
    %v235 = vlaneseq
    %v236 = vshrl.u32 %v235, 7
    %v237 = vsub.s32 %v234, %v236
    %v238 = vrot.slane %v173, %v237
    %vm239 = vcmask 326912
    %v240 = vsel %vm239, %v238, %v233
    %v241 = vadd.s32 %v208, 4294967256
    %v242 = vlaneseq
    %v243 = vshrl.u32 %v242, 7
    %v244 = vsub.s32 %v241, %v243
    %v245 = vrot.slane %v176, %v244
    %vm246 = vcmask 392512
    %v247 = vsel %vm246, %v245, %v240
    %v248 = vadd.s32 %v208, 4294967248
    %v249 = vlaneseq
    %v250 = vshrl.u32 %v249, 7
    %v251 = vsub.s32 %v248, %v250
    %v252 = vrot.slane %v179, %v251
    %vm253 = vcmask 458112
    %v254 = vsel %vm253, %v252, %v247
    %v255 = vadd.s32 %v208, 4294967240
    %v256 = vlaneseq
    %v257 = vshrl.u32 %v256, 7
    %v258 = vsub.s32 %v255, %v257
    %v259 = vrot.slane %v182, %v258
    %vm260 = vcmask 523712
    %v261 = vsel %vm260, %v259, %v254
    %v262 = vlaneseq
    %v263 = vshrl.u32 %v262, 7
    %v264 = vsub.s32 %v208, %v263
    %v265 = vrot.slane %v185, %v264
    %v266 = vlaneseq
    %v267 = vshrl.u32 %v266, 7
    %v268 = vsub.s32 %v213, %v267
    %v269 = vrot.slane %v188, %v268
    %v270 = vsel %vm218, %v269, %v265
    %v271 = vlaneseq
    %v272 = vshrl.u32 %v271, 7
    %v273 = vsub.s32 %v220, %v272
    %v274 = vrot.slane %v191, %v273
    %v275 = vsel %vm225, %v274, %v270
    %v276 = vlaneseq
    %v277 = vshrl.u32 %v276, 7
    %v278 = vsub.s32 %v227, %v277
    %v279 = vrot.slane %v194, %v278
    %v280 = vsel %vm232, %v279, %v275
    %v281 = vlaneseq
    %v282 = vshrl.u32 %v281, 7
    %v283 = vsub.s32 %v234, %v282
    %v284 = vrot.slane %v197, %v283
    %v285 = vsel %vm239, %v284, %v280
    %v286 = vlaneseq
    %v287 = vshrl.u32 %v286, 7
    %v288 = vsub.s32 %v241, %v287
    %v289 = vrot.slane %v200, %v288
    %v290 = vsel %vm246, %v289, %v285
    %v291 = vlaneseq
    %v292 = vshrl.u32 %v291, 7
    %v293 = vsub.s32 %v248, %v292
    %v294 = vrot.slane %v203, %v293
    %v295 = vsel %vm253, %v294, %v290
    %v296 = vlaneseq
    %v297 = vshrl.u32 %v296, 7
    %v298 = vsub.s32 %v255, %v297
    %v299 = vrot.slane %v206, %v298
    %v300 = vsel %vm260, %v299, %v295
    %vm301 = vcmask 1041409
    %v302 = vsel %vm301, %v300, %v261
    %v304 = vadd.f32 %v141, %v302
    %v305 = vlaneseq
    %v306 = vshrl.u32 %v305, 7
    %v307 = vsub.s32 1, %v306
    %v308 = vrot.slane %v65, %v307
    %v309 = vlaneseq
    %v310 = vshrl.u32 %v309, 7
    %v311 = vsub.s32 1, %v310
    %v312 = vrot.slane %v66, %v311
    %v313 = vlaneseq
    %v314 = vshrl.u32 %v313, 7
    %v315 = vsub.s32 1, %v314
    %v316 = vrot.slane %v67, %v315
    %319 = vbcast.lane.b32.xlu0 %v316, 256
    %v320 = vpop.permute.xlu0 %319
    %s322 = sor.u32 256, 8
    %323 = vbcast.lane.b32.xlu0 %v316, %s322
    %v324 = vpop.permute.xlu0 %323
    %s326 = sor.u32 256, 16
    %327 = vbcast.lane.b32.xlu0 %v316, %s326
    %v328 = vpop.permute.xlu0 %327
    %s330 = sor.u32 256, 24
    %331 = vbcast.lane.b32.xlu0 %v316, %s330
    %v332 = vpop.permute.xlu0 %331
    %s334 = sor.u32 256, 32
    %335 = vbcast.lane.b32.xlu0 %v316, %s334
    %v336 = vpop.permute.xlu0 %335
    %s338 = sor.u32 256, 40
    %339 = vbcast.lane.b32.xlu0 %v316, %s338
    %v340 = vpop.permute.xlu0 %339
    %s342 = sor.u32 256, 48
    %343 = vbcast.lane.b32.xlu0 %v316, %s342
    %v344 = vpop.permute.xlu0 %343
    %s346 = sor.u32 256, 56
    %347 = vbcast.lane.b32.xlu0 %v316, %s346
    %v348 = vpop.permute.xlu0 %347
    %v357 = vmul.f32 %v308, %v320
    %v358 = vmul.f32 %v308, %v324
    %v359 = vmul.f32 %v308, %v328
    %v360 = vmul.f32 %v308, %v332
    %v361 = vmul.f32 %v308, %v336
    %v362 = vmul.f32 %v308, %v340
    %v363 = vmul.f32 %v308, %v344
    %v364 = vmul.f32 %v308, %v348
    %v365 = vmul.f32 %v312, %v320
    %v366 = vmul.f32 %v312, %v324
    %v367 = vmul.f32 %v312, %v328
    %v368 = vmul.f32 %v312, %v332
    %v369 = vmul.f32 %v312, %v336
    %v370 = vmul.f32 %v312, %v340
    %v371 = vmul.f32 %v312, %v344
    %v372 = vmul.f32 %v312, %v348
    %389 = vset.pattern.permute.xlu0 0
    %390 = vperm.xlu0 %389, %v357
    %v391 = vpop.permute.xlu0 %390
    %392 = vset.pattern.permute.xlu0 0
    %393 = vperm.xlu0 %392, %v358
    %v394 = vpop.permute.xlu0 %393
    %395 = vset.pattern.permute.xlu0 0
    %396 = vperm.xlu0 %395, %v359
    %v397 = vpop.permute.xlu0 %396
    %398 = vset.pattern.permute.xlu0 0
    %399 = vperm.xlu0 %398, %v360
    %v400 = vpop.permute.xlu0 %399
    %401 = vset.pattern.permute.xlu0 0
    %402 = vperm.xlu0 %401, %v361
    %v403 = vpop.permute.xlu0 %402
    %404 = vset.pattern.permute.xlu0 0
    %405 = vperm.xlu0 %404, %v362
    %v406 = vpop.permute.xlu0 %405
    %407 = vset.pattern.permute.xlu0 0
    %408 = vperm.xlu0 %407, %v363
    %v409 = vpop.permute.xlu0 %408
    %410 = vset.pattern.permute.xlu0 0
    %411 = vperm.xlu0 %410, %v364
    %v412 = vpop.permute.xlu0 %411
    %413 = vset.pattern.permute.xlu0 0
    %414 = vperm.xlu0 %413, %v365
    %v415 = vpop.permute.xlu0 %414
    %416 = vset.pattern.permute.xlu0 0
    %417 = vperm.xlu0 %416, %v366
    %v418 = vpop.permute.xlu0 %417
    %419 = vset.pattern.permute.xlu0 0
    %420 = vperm.xlu0 %419, %v367
    %v421 = vpop.permute.xlu0 %420
    %422 = vset.pattern.permute.xlu0 0
    %423 = vperm.xlu0 %422, %v368
    %v424 = vpop.permute.xlu0 %423
    %425 = vset.pattern.permute.xlu0 0
    %426 = vperm.xlu0 %425, %v369
    %v427 = vpop.permute.xlu0 %426
    %428 = vset.pattern.permute.xlu0 0
    %429 = vperm.xlu0 %428, %v370
    %v430 = vpop.permute.xlu0 %429
    %431 = vset.pattern.permute.xlu0 0
    %432 = vperm.xlu0 %431, %v371
    %v433 = vpop.permute.xlu0 %432
    %434 = vset.pattern.permute.xlu0 0
    %435 = vperm.xlu0 %434, %v372
    %v436 = vpop.permute.xlu0 %435
    %v437 = vlaneseq
    %v438 = vshrl.u32 %v437, 7
    %v439 = vsub.s32 %v208, %v438
    %v440 = vrot.slane %v391, %v439
    %v441 = vlaneseq
    %v442 = vshrl.u32 %v441, 7
    %v443 = vsub.s32 %v213, %v442
    %v444 = vrot.slane %v394, %v443
    %v445 = vsel %vm218, %v444, %v440
    %v446 = vlaneseq
    %v447 = vshrl.u32 %v446, 7
    %v448 = vsub.s32 %v220, %v447
    %v449 = vrot.slane %v397, %v448
    %v450 = vsel %vm225, %v449, %v445
    %v451 = vlaneseq
    %v452 = vshrl.u32 %v451, 7
    %v453 = vsub.s32 %v227, %v452
    %v454 = vrot.slane %v400, %v453
    %v455 = vsel %vm232, %v454, %v450
    %v456 = vlaneseq
    %v457 = vshrl.u32 %v456, 7
    %v458 = vsub.s32 %v234, %v457
    %v459 = vrot.slane %v403, %v458
    %v460 = vsel %vm239, %v459, %v455
    %v461 = vlaneseq
    %v462 = vshrl.u32 %v461, 7
    %v463 = vsub.s32 %v241, %v462
    %v464 = vrot.slane %v406, %v463
    %v465 = vsel %vm246, %v464, %v460
    %v466 = vlaneseq
    %v467 = vshrl.u32 %v466, 7
    %v468 = vsub.s32 %v248, %v467
    %v469 = vrot.slane %v409, %v468
    %v470 = vsel %vm253, %v469, %v465
    %v471 = vlaneseq
    %v472 = vshrl.u32 %v471, 7
    %v473 = vsub.s32 %v255, %v472
    %v474 = vrot.slane %v412, %v473
    %v475 = vsel %vm260, %v474, %v470
    %v476 = vlaneseq
    %v477 = vshrl.u32 %v476, 7
    %v478 = vsub.s32 %v208, %v477
    %v479 = vrot.slane %v415, %v478
    %v480 = vlaneseq
    %v481 = vshrl.u32 %v480, 7
    %v482 = vsub.s32 %v213, %v481
    %v483 = vrot.slane %v418, %v482
    %v484 = vsel %vm218, %v483, %v479
    %v485 = vlaneseq
    %v486 = vshrl.u32 %v485, 7
    %v487 = vsub.s32 %v220, %v486
    %v488 = vrot.slane %v421, %v487
    %v489 = vsel %vm225, %v488, %v484
    %v490 = vlaneseq
    %v491 = vshrl.u32 %v490, 7
    %v492 = vsub.s32 %v227, %v491
    %v493 = vrot.slane %v424, %v492
    %v494 = vsel %vm232, %v493, %v489
    %v495 = vlaneseq
    %v496 = vshrl.u32 %v495, 7
    %v497 = vsub.s32 %v234, %v496
    %v498 = vrot.slane %v427, %v497
    %v499 = vsel %vm239, %v498, %v494
    %v500 = vlaneseq
    %v501 = vshrl.u32 %v500, 7
    %v502 = vsub.s32 %v241, %v501
    %v503 = vrot.slane %v430, %v502
    %v504 = vsel %vm246, %v503, %v499
    %v505 = vlaneseq
    %v506 = vshrl.u32 %v505, 7
    %v507 = vsub.s32 %v248, %v506
    %v508 = vrot.slane %v433, %v507
    %v509 = vsel %vm253, %v508, %v504
    %v510 = vlaneseq
    %v511 = vshrl.u32 %v510, 7
    %v512 = vsub.s32 %v255, %v511
    %v513 = vrot.slane %v436, %v512
    %v514 = vsel %vm260, %v513, %v509
    %v515 = vsel %vm301, %v514, %v475
    %v517 = vadd.f32 %v304, %v515
    %v518 = vlaneseq
    %v519 = vshrl.u32 %v518, 7
    %v520 = vsub.s32 2, %v519
    %v521 = vrot.slane %v65, %v520
    %v522 = vlaneseq
    %v523 = vshrl.u32 %v522, 7
    %v524 = vsub.s32 2, %v523
    %v525 = vrot.slane %v66, %v524
    %v526 = vlaneseq
    %v527 = vshrl.u32 %v526, 7
    %v528 = vsub.s32 2, %v527
    %v529 = vrot.slane %v67, %v528
    %532 = vbcast.lane.b32.xlu0 %v529, 256
    %v533 = vpop.permute.xlu0 %532
    %s535 = sor.u32 256, 8
    %536 = vbcast.lane.b32.xlu0 %v529, %s535
    %v537 = vpop.permute.xlu0 %536
    %s539 = sor.u32 256, 16
    %540 = vbcast.lane.b32.xlu0 %v529, %s539
    %v541 = vpop.permute.xlu0 %540
    %s543 = sor.u32 256, 24
    %544 = vbcast.lane.b32.xlu0 %v529, %s543
    %v545 = vpop.permute.xlu0 %544
    %s547 = sor.u32 256, 32
    %548 = vbcast.lane.b32.xlu0 %v529, %s547
    %v549 = vpop.permute.xlu0 %548
    %s551 = sor.u32 256, 40
    %552 = vbcast.lane.b32.xlu0 %v529, %s551
    %v553 = vpop.permute.xlu0 %552
    %s555 = sor.u32 256, 48
    %556 = vbcast.lane.b32.xlu0 %v529, %s555
    %v557 = vpop.permute.xlu0 %556
    %s559 = sor.u32 256, 56
    %560 = vbcast.lane.b32.xlu0 %v529, %s559
    %v561 = vpop.permute.xlu0 %560
    %v570 = vmul.f32 %v521, %v533
    %v571 = vmul.f32 %v521, %v537
    %v572 = vmul.f32 %v521, %v541
    %v573 = vmul.f32 %v521, %v545
    %v574 = vmul.f32 %v521, %v549
    %v575 = vmul.f32 %v521, %v553
    %v576 = vmul.f32 %v521, %v557
    %v577 = vmul.f32 %v521, %v561
    %v578 = vmul.f32 %v525, %v533
    %v579 = vmul.f32 %v525, %v537
    %v580 = vmul.f32 %v525, %v541
    %v581 = vmul.f32 %v525, %v545
    %v582 = vmul.f32 %v525, %v549
    %v583 = vmul.f32 %v525, %v553
    %v584 = vmul.f32 %v525, %v557
    %v585 = vmul.f32 %v525, %v561
    %602 = vset.pattern.permute.xlu0 0
    %603 = vperm.xlu0 %602, %v570
    %v604 = vpop.permute.xlu0 %603
    %605 = vset.pattern.permute.xlu0 0
    %606 = vperm.xlu0 %605, %v571
    %v607 = vpop.permute.xlu0 %606
    %608 = vset.pattern.permute.xlu0 0
    %609 = vperm.xlu0 %608, %v572
    %v610 = vpop.permute.xlu0 %609
    %611 = vset.pattern.permute.xlu0 0
    %612 = vperm.xlu0 %611, %v573
    %v613 = vpop.permute.xlu0 %612
    %614 = vset.pattern.permute.xlu0 0
    %615 = vperm.xlu0 %614, %v574
    %v616 = vpop.permute.xlu0 %615
    %617 = vset.pattern.permute.xlu0 0
    %618 = vperm.xlu0 %617, %v575
    %v619 = vpop.permute.xlu0 %618
    %620 = vset.pattern.permute.xlu0 0
    %621 = vperm.xlu0 %620, %v576
    %v622 = vpop.permute.xlu0 %621
    %623 = vset.pattern.permute.xlu0 0
    %624 = vperm.xlu0 %623, %v577
    %v625 = vpop.permute.xlu0 %624
    %626 = vset.pattern.permute.xlu0 0
    %627 = vperm.xlu0 %626, %v578
    %v628 = vpop.permute.xlu0 %627
    %629 = vset.pattern.permute.xlu0 0
    %630 = vperm.xlu0 %629, %v579
    %v631 = vpop.permute.xlu0 %630
    %632 = vset.pattern.permute.xlu0 0
    %633 = vperm.xlu0 %632, %v580
    %v634 = vpop.permute.xlu0 %633
    %635 = vset.pattern.permute.xlu0 0
    %636 = vperm.xlu0 %635, %v581
    %v637 = vpop.permute.xlu0 %636
    %638 = vset.pattern.permute.xlu0 0
    %639 = vperm.xlu0 %638, %v582
    %v640 = vpop.permute.xlu0 %639
    %641 = vset.pattern.permute.xlu0 0
    %642 = vperm.xlu0 %641, %v583
    %v643 = vpop.permute.xlu0 %642
    %644 = vset.pattern.permute.xlu0 0
    %645 = vperm.xlu0 %644, %v584
    %v646 = vpop.permute.xlu0 %645
    %647 = vset.pattern.permute.xlu0 0
    %648 = vperm.xlu0 %647, %v585
    %v649 = vpop.permute.xlu0 %648
    %v650 = vlaneseq
    %v651 = vshrl.u32 %v650, 7
    %v652 = vsub.s32 %v208, %v651
    %v653 = vrot.slane %v604, %v652
    %v654 = vlaneseq
    %v655 = vshrl.u32 %v654, 7
    %v656 = vsub.s32 %v213, %v655
    %v657 = vrot.slane %v607, %v656
    %v658 = vsel %vm218, %v657, %v653
    %v659 = vlaneseq
    %v660 = vshrl.u32 %v659, 7
    %v661 = vsub.s32 %v220, %v660
    %v662 = vrot.slane %v610, %v661
    %v663 = vsel %vm225, %v662, %v658
    %v664 = vlaneseq
    %v665 = vshrl.u32 %v664, 7
    %v666 = vsub.s32 %v227, %v665
    %v667 = vrot.slane %v613, %v666
    %v668 = vsel %vm232, %v667, %v663
    %v669 = vlaneseq
    %v670 = vshrl.u32 %v669, 7
    %v671 = vsub.s32 %v234, %v670
    %v672 = vrot.slane %v616, %v671
    %v673 = vsel %vm239, %v672, %v668
    %v674 = vlaneseq
    %v675 = vshrl.u32 %v674, 7
    %v676 = vsub.s32 %v241, %v675
    %v677 = vrot.slane %v619, %v676
    %v678 = vsel %vm246, %v677, %v673
    %v679 = vlaneseq
    %v680 = vshrl.u32 %v679, 7
    %v681 = vsub.s32 %v248, %v680
    %v682 = vrot.slane %v622, %v681
    %v683 = vsel %vm253, %v682, %v678
    %v684 = vlaneseq
    %v685 = vshrl.u32 %v684, 7
    %v686 = vsub.s32 %v255, %v685
    %v687 = vrot.slane %v625, %v686
    %v688 = vsel %vm260, %v687, %v683
    %v689 = vlaneseq
    %v690 = vshrl.u32 %v689, 7
    %v691 = vsub.s32 %v208, %v690
    %v692 = vrot.slane %v628, %v691
    %v693 = vlaneseq
    %v694 = vshrl.u32 %v693, 7
    %v695 = vsub.s32 %v213, %v694
    %v696 = vrot.slane %v631, %v695
    %v697 = vsel %vm218, %v696, %v692
    %v698 = vlaneseq
    %v699 = vshrl.u32 %v698, 7
    %v700 = vsub.s32 %v220, %v699
    %v701 = vrot.slane %v634, %v700
    %v702 = vsel %vm225, %v701, %v697
    %v703 = vlaneseq
    %v704 = vshrl.u32 %v703, 7
    %v705 = vsub.s32 %v227, %v704
    %v706 = vrot.slane %v637, %v705
    %v707 = vsel %vm232, %v706, %v702
    %v708 = vlaneseq
    %v709 = vshrl.u32 %v708, 7
    %v710 = vsub.s32 %v234, %v709
    %v711 = vrot.slane %v640, %v710
    %v712 = vsel %vm239, %v711, %v707
    %v713 = vlaneseq
    %v714 = vshrl.u32 %v713, 7
    %v715 = vsub.s32 %v241, %v714
    %v716 = vrot.slane %v643, %v715
    %v717 = vsel %vm246, %v716, %v712
    %v718 = vlaneseq
    %v719 = vshrl.u32 %v718, 7
    %v720 = vsub.s32 %v248, %v719
    %v721 = vrot.slane %v646, %v720
    %v722 = vsel %vm253, %v721, %v717
    %v723 = vlaneseq
    %v724 = vshrl.u32 %v723, 7
    %v725 = vsub.s32 %v255, %v724
    %v726 = vrot.slane %v649, %v725
    %v727 = vsel %vm260, %v726, %v722
    %v728 = vsel %vm301, %v727, %v688
    %v730 = vadd.f32 %v517, %v728
    %v731 = vmax.f32 %v730, 0.0
    %v732 = vpack.c.bf16 %v731, %v731
    %v733 = vld [vmem:[%s4] sm:$0xff]
    %v734 = vld [vmem:[%s4 + $0x8] sm:$0xff]
    %v735 = vld [vmem:[%s4 + $0x10] sm:$0xff]
    %v736 = vld [vmem:[%s4 + $0x18] sm:$0xff]
    %v737 = vld [vmem:[%s4 + $0x20] sm:$0xff]
    %v738 = vld [vmem:[%s4 + $0x28] sm:$0xff]
    %v739 = vld [vmem:[%s4 + $0x30] sm:$0xff]
    %v740 = vld [vmem:[%s4 + $0x38] sm:$0xff]
    %v741 = vld [vmem:[%s4 + $0x40] sm:$0xff]
    %v742 = vld [vmem:[%s4 + $0x48] sm:$0xff]
    %v743 = vld [vmem:[%s4 + $0x50] sm:$0xff]
    %v744 = vld [vmem:[%s4 + $0x58] sm:$0xff]
    %v745 = vld [vmem:[%s4 + $0x60] sm:$0xff]
    %v746 = vld [vmem:[%s4 + $0x68] sm:$0xff]
    %v747 = vld [vmem:[%s4 + $0x70] sm:$0xff]
    %v748 = vld [vmem:[%s4 + $0x78] sm:$0xff]
    %v749 = vld [vmem:[%s4 + $0x80] sm:$0xff]
    %v750 = vld [vmem:[%s4 + $0x88] sm:$0xff]
    %v751 = vld [vmem:[%s4 + $0x90] sm:$0xff]
    %v752 = vld [vmem:[%s4 + $0x98] sm:$0xff]
    %v753 = vld [vmem:[%s4 + $0xa0] sm:$0xff]
    %v754 = vld [vmem:[%s4 + $0xa8] sm:$0xff]
    %v755 = vld [vmem:[%s4 + $0xb0] sm:$0xff]
    %v756 = vld [vmem:[%s4 + $0xb8] sm:$0xff]
    %v757 = vld [vmem:[%s4 + $0xc0] sm:$0xff]
    %v758 = vld [vmem:[%s4 + $0xc8] sm:$0xff]
    %v759 = vld [vmem:[%s4 + $0xd0] sm:$0xff]
    %v760 = vld [vmem:[%s4 + $0xd8] sm:$0xff]
    %v761 = vld [vmem:[%s4 + $0xe0] sm:$0xff]
    %v762 = vld [vmem:[%s4 + $0xe8] sm:$0xff]
    %v763 = vld [vmem:[%s4 + $0xf0] sm:$0xff]
    %v764 = vld [vmem:[%s4 + $0xf8] sm:$0xff]
    %v765 = vld [vmem:[%s5] sm:$0xff]
    %v767 = vlaneseq
    %v768 = vshrl.u32 %v767, 7
    %v769 = vsub.s32 0, %v768
    %v770 = vrot.slane %v765, %v769
    %v771 = vlaneseq
    %v772 = vshrl.u32 %v771, 7
    %v773 = vsub.s32 1, %v772
    %v774 = vrot.slane %v765, %v773
    %v775 = vlaneseq
    %v776 = vshrl.u32 %v775, 7
    %v777 = vsub.s32 2, %v776
    %v778 = vrot.slane %v765, %v777
    %v779 = vlaneseq
    %v780 = vshrl.u32 %v779, 7
    %v781 = vsub.s32 3, %v780
    %v782 = vrot.slane %v765, %v781
    %v783 = vlaneseq
    %v784 = vshrl.u32 %v783, 7
    %v785 = vsub.s32 4, %v784
    %v786 = vrot.slane %v765, %v785
    %v787 = vlaneseq
    %v788 = vshrl.u32 %v787, 7
    %v789 = vsub.s32 5, %v788
    %v790 = vrot.slane %v765, %v789
    %v791 = vlaneseq
    %v792 = vshrl.u32 %v791, 7
    %v793 = vsub.s32 6, %v792
    %v794 = vrot.slane %v765, %v793
    %v795 = vlaneseq
    %v796 = vshrl.u32 %v795, 7
    %v797 = vsub.s32 7, %v796
    %v798 = vrot.slane %v765, %v797
    %v839 = vunpack.c.l.b16 %v733
    %v840 = vunpack.c.h.b16 %v733
    %v841 = vunpack.c.l.b16 %v734
    %v842 = vunpack.c.h.b16 %v734
    %v843 = vunpack.c.l.b16 %v735
    %v844 = vunpack.c.h.b16 %v735
    %v845 = vunpack.c.l.b16 %v736
    %v846 = vunpack.c.h.b16 %v736
    %v847 = vunpack.c.l.b16 %v737
    %v848 = vunpack.c.h.b16 %v737
    %v849 = vunpack.c.l.b16 %v738
    %v850 = vunpack.c.h.b16 %v738
    %v851 = vunpack.c.l.b16 %v739
    %v852 = vunpack.c.h.b16 %v739
    %v853 = vunpack.c.l.b16 %v740
    %v854 = vunpack.c.h.b16 %v740
    %v855 = vunpack.c.l.b16 %v741
    %v856 = vunpack.c.h.b16 %v741
    %v857 = vunpack.c.l.b16 %v742
    %v858 = vunpack.c.h.b16 %v742
    %v859 = vunpack.c.l.b16 %v743
    %v860 = vunpack.c.h.b16 %v743
    %v861 = vunpack.c.l.b16 %v744
    %v862 = vunpack.c.h.b16 %v744
    %v863 = vunpack.c.l.b16 %v745
    %v864 = vunpack.c.h.b16 %v745
    %v865 = vunpack.c.l.b16 %v746
    %v866 = vunpack.c.h.b16 %v746
    %v867 = vunpack.c.l.b16 %v747
    %v868 = vunpack.c.h.b16 %v747
    %v869 = vunpack.c.l.b16 %v748
    %v870 = vunpack.c.h.b16 %v748
    %v871 = vunpack.c.l.b16 %v749
    %v872 = vunpack.c.h.b16 %v749
    %v873 = vunpack.c.l.b16 %v750
    %v874 = vunpack.c.h.b16 %v750
    %v875 = vunpack.c.l.b16 %v751
    %v876 = vunpack.c.h.b16 %v751
    %v877 = vunpack.c.l.b16 %v752
    %v878 = vunpack.c.h.b16 %v752
    %v879 = vunpack.c.l.b16 %v753
    %v880 = vunpack.c.h.b16 %v753
    %v881 = vunpack.c.l.b16 %v754
    %v882 = vunpack.c.h.b16 %v754
    %v883 = vunpack.c.l.b16 %v755
    %v884 = vunpack.c.h.b16 %v755
    %v885 = vunpack.c.l.b16 %v756
    %v886 = vunpack.c.h.b16 %v756
    %v887 = vunpack.c.l.b16 %v757
    %v888 = vunpack.c.h.b16 %v757
    %v889 = vunpack.c.l.b16 %v758
    %v890 = vunpack.c.h.b16 %v758
    %v891 = vunpack.c.l.b16 %v759
    %v892 = vunpack.c.h.b16 %v759
    %v893 = vunpack.c.l.b16 %v760
    %v894 = vunpack.c.h.b16 %v760
    %v895 = vunpack.c.l.b16 %v761
    %v896 = vunpack.c.h.b16 %v761
    %v897 = vunpack.c.l.b16 %v762
    %v898 = vunpack.c.h.b16 %v762
    %v899 = vunpack.c.l.b16 %v763
    %v900 = vunpack.c.h.b16 %v763
    %v901 = vunpack.c.l.b16 %v764
    %v902 = vunpack.c.h.b16 %v764
    %v903 = vpack.c.b16 %v847, %v839
    %v904 = vpack.c.b16 %v848, %v840
    %v905 = vpack.c.b16 %v849, %v841
    %v906 = vpack.c.b16 %v850, %v842
    %v907 = vpack.c.b16 %v851, %v843
    %v908 = vpack.c.b16 %v852, %v844
    %v909 = vpack.c.b16 %v853, %v845
    %v910 = vpack.c.b16 %v854, %v846
    %v911 = vpack.c.b16 %v863, %v855
    %v912 = vpack.c.b16 %v864, %v856
    %v913 = vpack.c.b16 %v865, %v857
    %v914 = vpack.c.b16 %v866, %v858
    %v915 = vpack.c.b16 %v867, %v859
    %v916 = vpack.c.b16 %v868, %v860
    %v917 = vpack.c.b16 %v869, %v861
    %v918 = vpack.c.b16 %v870, %v862
    %v919 = vpack.c.b16 %v879, %v871
    %v920 = vpack.c.b16 %v880, %v872
    %v921 = vpack.c.b16 %v881, %v873
    %v922 = vpack.c.b16 %v882, %v874
    %v923 = vpack.c.b16 %v883, %v875
    %v924 = vpack.c.b16 %v884, %v876
    %v925 = vpack.c.b16 %v885, %v877
    %v926 = vpack.c.b16 %v886, %v878
    %v927 = vpack.c.b16 %v895, %v887
    %v928 = vpack.c.b16 %v896, %v888
    %v929 = vpack.c.b16 %v897, %v889
    %v930 = vpack.c.b16 %v898, %v890
    %v931 = vpack.c.b16 %v899, %v891
    %v932 = vpack.c.b16 %v900, %v892
    %v933 = vpack.c.b16 %v901, %v893
    %v934 = vpack.c.b16 %v902, %v894
    %vm967 = vcmask 523264
    %v969 = vsel %vm967, %v732, 0
    %971 = vmatprep.subr.bf16.mxu0 0
    %972 = vmatpush1.bf16.msra.mxu0 0
    %973 = vmatprep.subr.bf16.mxu0 0
    %974 = vmatpush1.bf16.msra.mxu0 0
    %975 = vmatprep.subr.bf16.mxu0 0
    %976 = vmatpush1.bf16.msra.mxu0 0
    %977 = vmatprep.subr.bf16.mxu0 0
    %978 = vmatpush1.bf16.msra.mxu0 0
    %979 = vmatprep.subr.bf16.mxu0 %v928
    %980 = vmatpush1.bf16.msra.mxu0 %v927
    %981 = vmatprep.subr.bf16.mxu0 %v920
    %982 = vmatpush1.bf16.msra.mxu0 %v919
    %983 = vmatprep.subr.bf16.mxu0 %v912
    %984 = vmatpush1.bf16.msra.mxu0 %v911
    %985 = vmatprep.subr.bf16.mxu0 %v904
    %986 = vmatpush1.bf16.msra.mxu0 %v903
    %987 = vmatprep.subr.bf16.mxu0 0
    %988 = vmatpush2.bf16.msra.mxu0 0
    %989 = vmatprep.subr.bf16.mxu0 0
    %990 = vmatpush2.bf16.msra.mxu0 0
    %991 = vmatprep.subr.bf16.mxu0 0
    %992 = vmatpush2.bf16.msra.mxu0 0
    %993 = vmatprep.subr.bf16.mxu0 0
    %994 = vmatpush2.bf16.msra.mxu0 0
    %995 = vmatprep.subr.bf16.mxu0 0
    %996 = vmatpush2.bf16.msra.mxu0 0
    %997 = vmatprep.subr.bf16.mxu0 0
    %998 = vmatpush2.bf16.msra.mxu0 0
    %999 = vmatprep.subr.bf16.mxu0 0
    %1000 = vmatpush2.bf16.msra.mxu0 0
    %1001 = vmatprep.subr.bf16.mxu0 0
    %1002 = vmatpush2.bf16.msra.mxu0 0
    %1003 = vmatprep.mubr.bf16.mxu0 0
    %1004 = vmatmul.mubr.bf16.gmra.mxu0 %v969
    %v1005 = vpop.f32.mrf.mxu0
    %v1006 = vadd.f32 %v770, %v1005
    %v1007 = vpop.f32.mrf.mxu0
    %v1008 = vadd.f32 %v774, %v1007
    %v1009 = vpop.f32.mrf.mxu0
    %v1010 = vpop.f32.mrf.mxu0
    %1011 = vdwg.mxu0
    %1012 = vmatprep.subr.bf16.mxu0 0
    %1013 = vmatpush1.bf16.msra.mxu0 0
    %1014 = vmatprep.subr.bf16.mxu0 0
    %1015 = vmatpush1.bf16.msra.mxu0 0
    %1016 = vmatprep.subr.bf16.mxu0 0
    %1017 = vmatpush1.bf16.msra.mxu0 0
    %1018 = vmatprep.subr.bf16.mxu0 0
    %1019 = vmatpush1.bf16.msra.mxu0 0
    %1020 = vmatprep.subr.bf16.mxu0 %v930
    %1021 = vmatpush1.bf16.msra.mxu0 %v929
    %1022 = vmatprep.subr.bf16.mxu0 %v922
    %1023 = vmatpush1.bf16.msra.mxu0 %v921
    %1024 = vmatprep.subr.bf16.mxu0 %v914
    %1025 = vmatpush1.bf16.msra.mxu0 %v913
    %1026 = vmatprep.subr.bf16.mxu0 %v906
    %1027 = vmatpush1.bf16.msra.mxu0 %v905
    %1028 = vmatprep.subr.bf16.mxu0 0
    %1029 = vmatpush2.bf16.msra.mxu0 0
    %1030 = vmatprep.subr.bf16.mxu0 0
    %1031 = vmatpush2.bf16.msra.mxu0 0
    %1032 = vmatprep.subr.bf16.mxu0 0
    %1033 = vmatpush2.bf16.msra.mxu0 0
    %1034 = vmatprep.subr.bf16.mxu0 0
    %1035 = vmatpush2.bf16.msra.mxu0 0
    %1036 = vmatprep.subr.bf16.mxu0 0
    %1037 = vmatpush2.bf16.msra.mxu0 0
    %1038 = vmatprep.subr.bf16.mxu0 0
    %1039 = vmatpush2.bf16.msra.mxu0 0
    %1040 = vmatprep.subr.bf16.mxu0 0
    %1041 = vmatpush2.bf16.msra.mxu0 0
    %1042 = vmatprep.subr.bf16.mxu0 0
    %1043 = vmatpush2.bf16.msra.mxu0 0
    %1044 = vmatprep.mubr.bf16.mxu0 0
    %1045 = vmatmul.mubr.bf16.gmra.mxu0 %v969
    %v1046 = vpop.f32.mrf.mxu0
    %v1047 = vadd.f32 %v778, %v1046
    %v1048 = vpop.f32.mrf.mxu0
    %v1049 = vadd.f32 %v782, %v1048
    %v1050 = vpop.f32.mrf.mxu0
    %v1051 = vpop.f32.mrf.mxu0
    %1052 = vdwg.mxu0
    %1053 = vmatprep.subr.bf16.mxu0 0
    %1054 = vmatpush1.bf16.msra.mxu0 0
    %1055 = vmatprep.subr.bf16.mxu0 0
    %1056 = vmatpush1.bf16.msra.mxu0 0
    %1057 = vmatprep.subr.bf16.mxu0 0
    %1058 = vmatpush1.bf16.msra.mxu0 0
    %1059 = vmatprep.subr.bf16.mxu0 0
    %1060 = vmatpush1.bf16.msra.mxu0 0
    %1061 = vmatprep.subr.bf16.mxu0 %v932
    %1062 = vmatpush1.bf16.msra.mxu0 %v931
    %1063 = vmatprep.subr.bf16.mxu0 %v924
    %1064 = vmatpush1.bf16.msra.mxu0 %v923
    %1065 = vmatprep.subr.bf16.mxu0 %v916
    %1066 = vmatpush1.bf16.msra.mxu0 %v915
    %1067 = vmatprep.subr.bf16.mxu0 %v908
    %1068 = vmatpush1.bf16.msra.mxu0 %v907
    %1069 = vmatprep.subr.bf16.mxu0 0
    %1070 = vmatpush2.bf16.msra.mxu0 0
    %1071 = vmatprep.subr.bf16.mxu0 0
    %1072 = vmatpush2.bf16.msra.mxu0 0
    %1073 = vmatprep.subr.bf16.mxu0 0
    %1074 = vmatpush2.bf16.msra.mxu0 0
    %1075 = vmatprep.subr.bf16.mxu0 0
    %1076 = vmatpush2.bf16.msra.mxu0 0
    %1077 = vmatprep.subr.bf16.mxu0 0
    %1078 = vmatpush2.bf16.msra.mxu0 0
    %1079 = vmatprep.subr.bf16.mxu0 0
    %1080 = vmatpush2.bf16.msra.mxu0 0
    %1081 = vmatprep.subr.bf16.mxu0 0
    %1082 = vmatpush2.bf16.msra.mxu0 0
    %1083 = vmatprep.subr.bf16.mxu0 0
    %1084 = vmatpush2.bf16.msra.mxu0 0
    %1085 = vmatprep.mubr.bf16.mxu0 0
    %1086 = vmatmul.mubr.bf16.gmra.mxu0 %v969
    %v1087 = vpop.f32.mrf.mxu0
    %v1088 = vadd.f32 %v786, %v1087
    %v1089 = vpop.f32.mrf.mxu0
    %v1090 = vadd.f32 %v790, %v1089
    %v1091 = vpop.f32.mrf.mxu0
    %v1092 = vpop.f32.mrf.mxu0
    %1093 = vdwg.mxu0
    %1094 = vmatprep.subr.bf16.mxu0 0
    %1095 = vmatpush1.bf16.msra.mxu0 0
    %1096 = vmatprep.subr.bf16.mxu0 0
    %1097 = vmatpush1.bf16.msra.mxu0 0
    %1098 = vmatprep.subr.bf16.mxu0 0
    %1099 = vmatpush1.bf16.msra.mxu0 0
    %1100 = vmatprep.subr.bf16.mxu0 0
    %1101 = vmatpush1.bf16.msra.mxu0 0
    %1102 = vmatprep.subr.bf16.mxu0 %v934
    %1103 = vmatpush1.bf16.msra.mxu0 %v933
    %1104 = vmatprep.subr.bf16.mxu0 %v926
    %1105 = vmatpush1.bf16.msra.mxu0 %v925
    %1106 = vmatprep.subr.bf16.mxu0 %v918
    %1107 = vmatpush1.bf16.msra.mxu0 %v917
    %1108 = vmatprep.subr.bf16.mxu0 %v910
    %1109 = vmatpush1.bf16.msra.mxu0 %v909
    %1110 = vmatprep.subr.bf16.mxu0 0
    %1111 = vmatpush2.bf16.msra.mxu0 0
    %1112 = vmatprep.subr.bf16.mxu0 0
    %1113 = vmatpush2.bf16.msra.mxu0 0
    %1114 = vmatprep.subr.bf16.mxu0 0
    %1115 = vmatpush2.bf16.msra.mxu0 0
    %1116 = vmatprep.subr.bf16.mxu0 0
    %1117 = vmatpush2.bf16.msra.mxu0 0
    %1118 = vmatprep.subr.bf16.mxu0 0
    %1119 = vmatpush2.bf16.msra.mxu0 0
    %1120 = vmatprep.subr.bf16.mxu0 0
    %1121 = vmatpush2.bf16.msra.mxu0 0
    %1122 = vmatprep.subr.bf16.mxu0 0
    %1123 = vmatpush2.bf16.msra.mxu0 0
    %1124 = vmatprep.subr.bf16.mxu0 0
    %1125 = vmatpush2.bf16.msra.mxu0 0
    %1126 = vmatprep.mubr.bf16.mxu0 0
    %1127 = vmatmul.mubr.bf16.gmra.mxu0 %v969
    %v1128 = vpop.f32.mrf.mxu0
    %v1129 = vadd.f32 %v794, %v1128
    %v1130 = vpop.f32.mrf.mxu0
    %v1131 = vadd.f32 %v798, %v1130
    %v1132 = vpop.f32.mrf.mxu0
    %v1133 = vpop.f32.mrf.mxu0
    %1134 = vdwg.mxu0
    %v1143 = vcombine.low %v1006, %v1008
    %v1144 = vcombine.low %v1047, %v1049
    %v1146 = vunpack.c.l.s4 1983009808
    %v1147 = vunpack.c.0.s8 %v1146
    %v1148 = vlaneseq
    %v1149 = vshrl.u32 %v1148, 7
    %v1150 = vsub.s32 %v1147, %v1149
    %v1151 = vrot.slane %v1143, %v1150
    %v1153 = vunpack.c.l.s4 1983009808
    %v1154 = vunpack.c.0.s8 %v1153
    %v1155 = vlaneseq
    %v1156 = vshrl.u32 %v1155, 7
    %v1157 = vsub.s32 %v1154, %v1156
    %v1158 = vrot.slane %v1144, %v1157
    %v1159 = vcombine.low %v1151, %v1158
    %v1160 = vcombine.low %v1088, %v1090
    %v1161 = vcombine.low %v1129, %v1131
    %v1163 = vunpack.c.l.s4 1983009808
    %v1164 = vunpack.c.0.s8 %v1163
    %v1165 = vlaneseq
    %v1166 = vshrl.u32 %v1165, 7
    %v1167 = vsub.s32 %v1164, %v1166
    %v1168 = vrot.slane %v1160, %v1167
    %v1170 = vunpack.c.l.s4 1983009808
    %v1171 = vunpack.c.0.s8 %v1170
    %v1172 = vlaneseq
    %v1173 = vshrl.u32 %v1172, 7
    %v1174 = vsub.s32 %v1171, %v1173
    %v1175 = vrot.slane %v1161, %v1174
    %v1176 = vcombine.low %v1168, %v1175
    %1179 = vst [vmem:[#allocation2] sm:$0xff] %v1159
    %1180 = vst [vmem:[#allocation2 + $0x8] sm:$0xff] %v1176
    %v1181 = vld [vmem:[%s6] sm:$0xf]
    %v1182 = vld [vmem:[%s6 + $0x4] sm:$0xf]
    %v1183 = vld [vmem:[%s6 + $0x8] sm:$0xf]
    %v1184 = vld [vmem:[%s6 + $0xc] sm:$0xf]
    %v1185 = vld [vmem:[%s6 + $0x10] sm:$0xf]
    %v1186 = vld [vmem:[%s6 + $0x14] sm:$0xf]
    %v1187 = vld [vmem:[%s6 + $0x18] sm:$0xf]
    %v1188 = vld [vmem:[%s6 + $0x1c] sm:$0xf]
    %v1189 = vld [vmem:[%s8] sm:$0x1]
    %v1191 = vlaneseq
    %v1192 = vshrl.u32 %v1191, 7
    %v1193 = vsub.s32 0, %v1192
    %v1194 = vrot.slane %v1189, %v1193
    %v1204 = vunpack.c.l.b16 %v1181
    %v1205 = vunpack.c.l.b16 %v1182
    %v1206 = vunpack.c.l.b16 %v1183
    %v1207 = vunpack.c.l.b16 %v1184
    %v1208 = vunpack.c.l.b16 %v1185
    %v1209 = vunpack.c.l.b16 %v1186
    %v1210 = vunpack.c.l.b16 %v1187
    %v1211 = vunpack.c.l.b16 %v1188
    %v1212 = vpack.c.b16 %v1205, %v1204
    %v1213 = vpack.c.b16 %v1207, %v1206
    %v1214 = vpack.c.b16 %v1209, %v1208
    %v1215 = vpack.c.b16 %v1211, %v1210
    %1220 = vmatprep.subr.bf16.mxu0 0
    %1221 = vmatpush1.bf16.msra.mxu0 0
    %1222 = vmatprep.subr.bf16.mxu0 0
    %1223 = vmatpush1.bf16.msra.mxu0 0
    %1224 = vmatprep.subr.bf16.mxu0 0
    %1225 = vmatpush1.bf16.msra.mxu0 0
    %1226 = vmatprep.subr.bf16.mxu0 0
    %1227 = vmatpush1.bf16.msra.mxu0 0
    %1228 = vmatprep.subr.bf16.mxu0 0
    %1229 = vmatpush1.bf16.msra.mxu0 %v1215
    %1230 = vmatprep.subr.bf16.mxu0 0
    %1231 = vmatpush1.bf16.msra.mxu0 %v1214
    %1232 = vmatprep.subr.bf16.mxu0 0
    %1233 = vmatpush1.bf16.msra.mxu0 %v1213
    %1234 = vmatprep.subr.bf16.mxu0 0
    %1235 = vmatpush1.bf16.msra.mxu0 %v1212
    %1236 = vmatprep.subr.bf16.mxu0 0
    %1237 = vmatpush2.bf16.msra.mxu0 0
    %1238 = vmatprep.subr.bf16.mxu0 0
    %1239 = vmatpush2.bf16.msra.mxu0 0
    %1240 = vmatprep.subr.bf16.mxu0 0
    %1241 = vmatpush2.bf16.msra.mxu0 0
    %1242 = vmatprep.subr.bf16.mxu0 0
    %1243 = vmatpush2.bf16.msra.mxu0 0
    %1244 = vmatprep.subr.bf16.mxu0 0
    %1245 = vmatpush2.bf16.msra.mxu0 0
    %1246 = vmatprep.subr.bf16.mxu0 0
    %1247 = vmatpush2.bf16.msra.mxu0 0
    %1248 = vmatprep.subr.bf16.mxu0 0
    %1249 = vmatpush2.bf16.msra.mxu0 0
    %1250 = vmatprep.subr.bf16.mxu0 0
    %1251 = vmatpush2.bf16.msra.mxu0 0
    %1252 = vmatprep.mubr.bf16.mxu0 0
    %1253 = vmatmul.mubr.bf16.gmra.mxu0 %v969
    %v1254 = vpop.f32.mrf.mxu0
    %v1255 = vadd.f32 %v1194, %v1254
    %v1256 = vpop.f32.mrf.mxu0
    %v1257 = vpop.f32.mrf.mxu0
    %v1258 = vpop.f32.mrf.mxu0
    %1259 = vdwg.mxu0
    %v1260 = vld [vmem:[%s7] sm:$0xf]
    %v1261 = vld [vmem:[%s7 + $0x4] sm:$0xf]
    %v1262 = vld [vmem:[%s7 + $0x8] sm:$0xf]
    %v1263 = vld [vmem:[%s7 + $0xc] sm:$0xf]
    %v1264 = vld [vmem:[%s7 + $0x10] sm:$0xf]
    %v1265 = vld [vmem:[%s7 + $0x14] sm:$0xf]
    %v1266 = vld [vmem:[%s7 + $0x18] sm:$0xf]
    %v1267 = vld [vmem:[%s7 + $0x1c] sm:$0xf]
    %v1268 = vld [vmem:[%s9] sm:$0x1]
    %v1270 = vlaneseq
    %v1271 = vshrl.u32 %v1270, 7
    %v1272 = vsub.s32 0, %v1271
    %v1273 = vrot.slane %v1268, %v1272
    %v1283 = vunpack.c.l.b16 %v1260
    %v1284 = vunpack.c.l.b16 %v1261
    %v1285 = vunpack.c.l.b16 %v1262
    %v1286 = vunpack.c.l.b16 %v1263
    %v1287 = vunpack.c.l.b16 %v1264
    %v1288 = vunpack.c.l.b16 %v1265
    %v1289 = vunpack.c.l.b16 %v1266
    %v1290 = vunpack.c.l.b16 %v1267
    %v1291 = vpack.c.b16 %v1284, %v1283
    %v1292 = vpack.c.b16 %v1286, %v1285
    %v1293 = vpack.c.b16 %v1288, %v1287
    %v1294 = vpack.c.b16 %v1290, %v1289
    %1299 = vmatprep.subr.bf16.mxu0 0
    %1300 = vmatpush1.bf16.msra.mxu0 0
    %1301 = vmatprep.subr.bf16.mxu0 0
    %1302 = vmatpush1.bf16.msra.mxu0 0
    %1303 = vmatprep.subr.bf16.mxu0 0
    %1304 = vmatpush1.bf16.msra.mxu0 0
    %1305 = vmatprep.subr.bf16.mxu0 0
    %1306 = vmatpush1.bf16.msra.mxu0 0
    %1307 = vmatprep.subr.bf16.mxu0 0
    %1308 = vmatpush1.bf16.msra.mxu0 %v1294
    %1309 = vmatprep.subr.bf16.mxu0 0
    %1310 = vmatpush1.bf16.msra.mxu0 %v1293
    %1311 = vmatprep.subr.bf16.mxu0 0
    %1312 = vmatpush1.bf16.msra.mxu0 %v1292
    %1313 = vmatprep.subr.bf16.mxu0 0
    %1314 = vmatpush1.bf16.msra.mxu0 %v1291
    %1315 = vmatprep.subr.bf16.mxu0 0
    %1316 = vmatpush2.bf16.msra.mxu0 0
    %1317 = vmatprep.subr.bf16.mxu0 0
    %1318 = vmatpush2.bf16.msra.mxu0 0
    %1319 = vmatprep.subr.bf16.mxu0 0
    %1320 = vmatpush2.bf16.msra.mxu0 0
    %1321 = vmatprep.subr.bf16.mxu0 0
    %1322 = vmatpush2.bf16.msra.mxu0 0
    %1323 = vmatprep.subr.bf16.mxu0 0
    %1324 = vmatpush2.bf16.msra.mxu0 0
    %1325 = vmatprep.subr.bf16.mxu0 0
    %1326 = vmatpush2.bf16.msra.mxu0 0
    %1327 = vmatprep.subr.bf16.mxu0 0
    %1328 = vmatpush2.bf16.msra.mxu0 0
    %1329 = vmatprep.subr.bf16.mxu0 0
    %1330 = vmatpush2.bf16.msra.mxu0 0
    %1331 = vmatprep.mubr.bf16.mxu0 0
    %1332 = vmatmul.mubr.bf16.gmra.mxu0 %v969
    %v1333 = vpop.f32.mrf.mxu0
    %v1334 = vadd.f32 %v1273, %v1333
    %v1335 = vpop.f32.mrf.mxu0
    %v1336 = vpop.f32.mrf.mxu0
    %v1337 = vpop.f32.mrf.mxu0
    %1338 = vdwg.mxu0
    %v1339 = vld [vmem:[%s10] sm:$0x1]
    %v1340 = vtanh.pop %v1255
    %v1341 = vmul.f32 %v1340, 0.8
    %v1343 = vlaneseq
    %v1344 = vshrl.u32 %v1343, 7
    %v1345 = vsub.s32 0, %v1344
    %v1346 = vrot.slane %v1339, %v1345
    %v1348 = vadd.f32 %v1346, %v1341
    %v1349 = vld [vmem:[%s11] sm:$0x1]
    %v1350 = vtanh.pop %v1334
    %v1351 = vmul.f32 %v1350, 0.8
    %v1353 = vlaneseq
    %v1354 = vshrl.u32 %v1353, 7
    %v1355 = vsub.s32 0, %v1354
    %v1356 = vrot.slane %v1349, %v1355
    %v1358 = vadd.f32 %v1356, %v1351
    %v1360 = vrot.slane %v1348, 1
    %1361 = vrot.lane.b32.xlu0 %v1360, 64
    %v1362 = vpop.permute.xlu0 %1361
    %v1364 = vsel %vm967, %v1348, %v1362
    %v1366 = vrot.slane %v1358, 1
    %1367 = vrot.lane.b32.xlu0 %v1366, 64
    %v1368 = vpop.permute.xlu0 %1367
    %v1370 = vsel %vm967, %v1358, %v1368
    %v1371 = vld [vmem:[%s1] sm:$0xff]
    %v1372 = vld [vmem:[%s1 + $0x8] sm:$0xff]
    %v1373 = vld [vmem:[%s1 + $0x10] sm:$0xff]
    %v1374 = vld [vmem:[%s1 + $0x18] sm:$0xff]
    %v1375 = vld [vmem:[%s1 + $0x20] sm:$0xff]
    %v1376 = vld [vmem:[%s1 + $0x28] sm:$0xff]
    %v1377 = vld [vmem:[%s1 + $0x30] sm:$0xff]
    %v1378 = vld [vmem:[%s1 + $0x38] sm:$0xff]
    %v1379 = vld [vmem:[%s1 + $0x40] sm:$0xff]
    %v1380 = vld [vmem:[%s1 + $0x48] sm:$0xff]
    %v1381 = vld [vmem:[%s1 + $0x50] sm:$0xff]
    %v1382 = vld [vmem:[%s1 + $0x58] sm:$0xff]
    %vm1383 = vcmask 261120
    %v1384 = vsel %vm1383, %v1371, 0.0
    %v1385 = vsel %vm1383, %v1375, 0.0
    %v1386 = vadd.f32 %v1384, %v1385
    %v1387 = vsel %vm1383, %v1379, 0.0
    %v1388 = vadd.f32 %v1386, %v1387
    %v1389 = vsel %vm1383, %v1372, 0.0
    %v1390 = vsel %vm1383, %v1376, 0.0
    %v1391 = vadd.f32 %v1389, %v1390
    %v1392 = vsel %vm1383, %v1380, 0.0
    %v1393 = vadd.f32 %v1391, %v1392
    %v1394 = vsel %vm1383, %v1373, 0.0
    %v1395 = vsel %vm1383, %v1377, 0.0
    %v1396 = vadd.f32 %v1394, %v1395
    %v1397 = vsel %vm1383, %v1381, 0.0
    %v1398 = vadd.f32 %v1396, %v1397
    %v1399 = vsel %vm1383, %v1374, 0.0
    %v1400 = vsel %vm1383, %v1378, 0.0
    %v1401 = vadd.f32 %v1399, %v1400
    %v1402 = vsel %vm1383, %v1382, 0.0
    %v1403 = vadd.f32 %v1401, %v1402
    %v1404 = vrcp.pop 3.0
    %v1405 = vmul.f32 %v1388, %v1404
    %v1406 = vmul.f32 %v1393, %v1404
    %v1407 = vmul.f32 %v1398, %v1404
    %v1408 = vmul.f32 %v1403, %v1404
    %v1409 = vlaneseq
    %v1410 = vshrl.u32 %v1409, 7
    %v1411 = vadd.s32 %v1410, 8
    %v1412 = vadd.s32 %v1410, 16
    %v1413 = vadd.s32 %v1410, 24
    %v1414 = vand.u32 %v1410, 15
    %v1415 = vand.u32 %v1411, 15
    %v1416 = vand.u32 %v1412, 15
    %v1417 = vand.u32 %v1413, 15
    %v1418 = vcvt.s32.f32 %v1414
    %v1419 = vcvt.s32.f32 %v1415
    %v1420 = vcvt.s32.f32 %v1416
    %v1421 = vcvt.s32.f32 %v1417
    %vm1422 = vcmp.ge.s32.totalorder %v1410, 16
    %vm1423 = vcmp.ge.s32.totalorder %v1411, 16
    %vm1424 = vcmp.ge.s32.totalorder %v1412, 16
    %vm1425 = vcmp.ge.s32.totalorder %v1413, 16
    %vm1426 = vcmp.ge.s32.totalorder %v208, 64
    %vm1427 = vmxor %vm1422, %vm1426
    %vm1428 = vmxor %vm1423, %vm1426
    %vm1429 = vmxor %vm1424, %vm1426
    %vm1430 = vmxor %vm1425, %vm1426
    %vm1431 = vmxor %vm1427, 1
    %vm1432 = vmxor %vm1428, 1
    %vm1433 = vmxor %vm1429, 1
    %vm1434 = vmxor %vm1430, 1
    %v1435 = vlaneseq
    %v1436 = vshrl.u32 %v1435, 7
    %v1437 = vsub.s32 0, %v1436
    %v1438 = vrot.slane %v1364, %v1437
    %v1439 = vsub.f32 %v1438, %v1418
    %v1440 = vsub.f32 %v1438, %v1419
    %v1441 = vsub.f32 %v1438, %v1420
    %v1442 = vsub.f32 %v1438, %v1421
    %v1443 = vand.u32 2147483647, %v1439
    %v1444 = vand.u32 2147483647, %v1440
    %v1445 = vand.u32 2147483647, %v1441
    %v1446 = vand.u32 2147483647, %v1442
    %v1447 = vsub.f32 1.0, %v1443
    %v1448 = vsub.f32 1.0, %v1444
    %v1449 = vsub.f32 1.0, %v1445
    %v1450 = vsub.f32 1.0, %v1446
    %v1451 = vmax.f32 %v1447, 0.0
    %v1452 = vmax.f32 %v1448, 0.0
    %v1453 = vmax.f32 %v1449, 0.0
    %v1454 = vmax.f32 %v1450, 0.0
    %v1455 = vsel %vm1431, %v1451, 0.0
    %v1456 = vsel %vm1432, %v1452, 0.0
    %v1457 = vsel %vm1433, %v1453, 0.0
    %v1458 = vsel %vm1434, %v1454, 0.0
    %v1459 = vlaneseq
    %v1460 = vshrl.u32 %v1459, 7
    %v1461 = vsub.s32 0, %v1460
    %v1462 = vrot.slane %v1370, %v1461
    %v1463 = vsub.f32 %v1462, %v1418
    %v1464 = vsub.f32 %v1462, %v1419
    %v1465 = vsub.f32 %v1462, %v1420
    %v1466 = vsub.f32 %v1462, %v1421
    %v1467 = vand.u32 2147483647, %v1463
    %v1468 = vand.u32 2147483647, %v1464
    %v1469 = vand.u32 2147483647, %v1465
    %v1470 = vand.u32 2147483647, %v1466
    %v1471 = vsub.f32 1.0, %v1467
    %v1472 = vsub.f32 1.0, %v1468
    %v1473 = vsub.f32 1.0, %v1469
    %v1474 = vsub.f32 1.0, %v1470
    %v1475 = vmax.f32 %v1471, 0.0
    %v1476 = vmax.f32 %v1472, 0.0
    %v1477 = vmax.f32 %v1473, 0.0
    %v1478 = vmax.f32 %v1474, 0.0
    %v1479 = vsel %vm1431, %v1475, 0.0
    %v1480 = vsel %vm1432, %v1476, 0.0
    %v1481 = vsel %vm1433, %v1477, 0.0
    %v1482 = vsel %vm1434, %v1478, 0.0
    %v1484 = vsel %vm1383, %v1405, 0
    %v1487 = vsel %vm1383, %v1406, 0
    %v1490 = vsel %vm1383, %v1407, 0
    %v1493 = vsel %vm1383, %v1408, 0
    %1495 = vmatprep.subr.mxu0 0.0
    %1496 = vmatpush1.msra.mxu0 0.0
    %1497 = vmatprep.subr.mxu0 0.0
    %1498 = vmatpush1.msra.mxu0 0.0
    %1499 = vmatprep.subr.mxu0 0.0
    %1500 = vmatpush1.msra.mxu0 0.0
    %1501 = vmatprep.subr.mxu0 0.0
    %1502 = vmatpush1.msra.mxu0 0.0
    %1503 = vmatprep.subr.mxu0 0.0
    %1504 = vmatpush1.msra.mxu0 0.0
    %1505 = vmatprep.subr.mxu0 0.0
    %1506 = vmatpush1.msra.mxu0 0.0
    %1507 = vmatprep.subr.mxu0 0.0
    %1508 = vmatpush1.msra.mxu0 0.0
    %1509 = vmatprep.subr.mxu0 0.0
    %1510 = vmatpush1.msra.mxu0 0.0
    %1511 = vmatprep.subr.mxu0 0.0
    %1512 = vmatpush1.msra.mxu0 0.0
    %1513 = vmatprep.subr.mxu0 0.0
    %1514 = vmatpush1.msra.mxu0 0.0
    %1515 = vmatprep.subr.mxu0 0.0
    %1516 = vmatpush1.msra.mxu0 0.0
    %1517 = vmatprep.subr.mxu0 0.0
    %1518 = vmatpush1.msra.mxu0 0.0
    %1519 = vmatprep.subr.mxu0 0.0
    %1520 = vmatpush1.msra.mxu0 %v1458
    %1521 = vmatprep.subr.mxu0 0.0
    %1522 = vmatpush1.msra.mxu0 %v1457
    %1523 = vmatprep.subr.mxu0 0.0
    %1524 = vmatpush1.msra.mxu0 %v1456
    %1525 = vmatprep.subr.mxu0 0.0
    %1526 = vmatpush1.msra.mxu0 %v1455
    %1527 = vmatprep.subr.mxu0 0.0
    %1528 = vmatpush2.msra.mxu0 0.0
    %1529 = vmatprep.subr.mxu0 0.0
    %1530 = vmatpush2.msra.mxu0 0.0
    %1531 = vmatprep.subr.mxu0 0.0
    %1532 = vmatpush2.msra.mxu0 0.0
    %1533 = vmatprep.subr.mxu0 0.0
    %1534 = vmatpush2.msra.mxu0 0.0
    %1535 = vmatprep.subr.mxu0 0.0
    %1536 = vmatpush2.msra.mxu0 0.0
    %1537 = vmatprep.subr.mxu0 0.0
    %1538 = vmatpush2.msra.mxu0 0.0
    %1539 = vmatprep.subr.mxu0 0.0
    %1540 = vmatpush2.msra.mxu0 0.0
    %1541 = vmatprep.subr.mxu0 0.0
    %1542 = vmatpush2.msra.mxu0 0.0
    %1543 = vmatprep.subr.mxu0 0.0
    %1544 = vmatpush2.msra.mxu0 0.0
    %1545 = vmatprep.subr.mxu0 0.0
    %1546 = vmatpush2.msra.mxu0 0.0
    %1547 = vmatprep.subr.mxu0 0.0
    %1548 = vmatpush2.msra.mxu0 0.0
    %1549 = vmatprep.subr.mxu0 0.0
    %1550 = vmatpush2.msra.mxu0 0.0
    %1551 = vmatprep.subr.mxu0 0.0
    %1552 = vmatpush2.msra.mxu0 0.0
    %1553 = vmatprep.subr.mxu0 0.0
    %1554 = vmatpush2.msra.mxu0 0.0
    %1555 = vmatprep.subr.mxu0 0.0
    %1556 = vmatpush2.msra.mxu0 0.0
    %1557 = vmatprep.subr.mxu0 0.0
    %1558 = vmatpush2.msra.mxu0 0.0
    %1559 = vmatprep.mubr.f32.mxu0 0.0
    %1560 = vmatmul.mubr.f32.gmra.mxu0 %v1484
    %v1561 = vpop.f32.mrf.mxu0
    %v1562 = vadd.f32 0.0, %v1561
    %v1563 = vpop.f32.mrf.mxu0
    %1564 = vmatprep.mubr.f32.mxu0 0.0
    %1565 = vmatmul.mubr.f32.gmra.mxu0 %v1487
    %v1566 = vpop.f32.mrf.mxu0
    %v1567 = vadd.f32 0.0, %v1566
    %v1568 = vpop.f32.mrf.mxu0
    %1569 = vmatprep.mubr.f32.mxu0 0.0
    %1570 = vmatmul.mubr.f32.gmra.mxu0 %v1490
    %v1571 = vpop.f32.mrf.mxu0
    %v1572 = vadd.f32 0.0, %v1571
    %v1573 = vpop.f32.mrf.mxu0
    %1574 = vmatprep.mubr.f32.mxu0 0.0
    %1575 = vmatmul.mubr.f32.gmra.mxu0 %v1493
    %v1576 = vpop.f32.mrf.mxu0
    %v1577 = vadd.f32 0.0, %v1576
    %v1578 = vpop.f32.mrf.mxu0
    %1579 = vdwg.mxu0
    %v1580 = vmul.f32 %v1479, %v1562
    %v1581 = vmul.f32 %v1480, %v1567
    %v1582 = vmul.f32 %v1481, %v1572
    %v1583 = vmul.f32 %v1482, %v1577
    %v1584 = vadd.f32 %v1580, %v1581
    %v1585 = vadd.f32 %v1584, %v1582
    %v1586 = vadd.f32 %v1585, %v1583
    %v1587 = vrot.slane %v1586, 4
    %v1588 = vadd.f32 %v1586, %v1587
    %v1589 = vrot.slane %v1588, 2
    %v1590 = vadd.f32 %v1588, %v1589
    %v1591 = vrot.slane %v1590, 1
    %v1592 = vadd.f32 %v1590, %v1591
    %1593 = vst [vmem:[%s13] sm:$0x1] %v1592
    // Predicated region
    $region50: #{forward.1} parent=1 // pred_check
      _
    $region51: #{forward.1} parent=1 // pred_check_branch
      %1595 = sbr.rel (0) target = $region53
    $region52: #{forward.1} parent=1 // pred_region
      %s1597 = ssub.s32 256, 256
      %1598 = vsyncadd [#allocation3], %s1597
      %s1600 = sshll.u32 [#allocation2], 4
      %s1601 = int_to_ptr.vmem [resolvable:$true] %s1600
      %1603 = dma.vmem_to_hbm [thread:$0]  %s1601, 256, %s12, [#allocation3]
    $region53: #{forward.1} parent=1 // pred_fallthru
      _
    // Predicated region
    $region54: #{forward.1} parent=1 // pred_check
      _
    $region55: #{forward.1} parent=1 // pred_check_branch
      %1605 = sbr.rel (0) target = $region57
    $region56: #{forward.1} parent=1 // pred_region
      _
    $region57: #{forward.1} parent=1 // pred_fallthru
      _
    // Predicated region
    $region58: #{forward.1} parent=1 // pred_check
      _
    $region59: #{forward.1} parent=1 // pred_check_branch
      %1607 = sbr.rel (0) target = $region61
    $region60: #{forward.1} parent=1 // pred_region
      %1608 = dma.done [#allocation3], 256
    $region61: #{forward.1} parent=1 // pred_fallthru
      _
    // Predicated region
    $region62: #{forward.1} parent=1 // pred_check
      _
    $region63: #{forward.1} parent=1 // pred_check_branch
      %1610 = sbr.rel (0) target = $region65
    $region64: #{forward.1} parent=1 // pred_region
      _
    $region65: #{forward.1} parent=1 // pred_fallthru
      _
    %1611 = vsyncpa [#allocation3], 1

</llo_original>
